<compile_context>
chip_gen: v7x
topology: tpu7x:2x2x1
jax: 0.10.0
libtpu: 0.0.40
codegen_flags: <defaults>
</compile_context>

<pallas_src>
import jax
import jax.numpy as jnp
import numpy as np
from jax.experimental import pallas as pl
from jax.experimental.pallas import tpu as pltpu

N_MU = 10
HID = 50
DT = 0.01  # args.dt stand-in (deterministic, in-script)


def _average_mu_kernel(x_ref, p_ref, w2_ref, bias_ref, o_ref):
    """x:(B,1)  p:(N_MU,4,HID) packed vectors  w2:(N_MU,HID,HID)  bias:(1,1) SMEM  o:(B,1)."""
    x = x_ref[...]                                            # (B, 1) float32
    y = jnp.zeros(o_ref.shape, jnp.float32)

    # Static unroll over the 10 experts; every slice below is compile-time static.
    for e in range(N_MU):
        w1 = p_ref[e, 0:1, :]                                 # (1, HID) Linear(1,50).weight^T
        b1 = p_ref[e, 1:2, :]                                 # (1, HID)
        b2 = p_ref[e, 2:3, :]                                 # (1, HID)
        w3 = p_ref[e, 3:4, :]                                 # (1, HID) pre-scaled by w_e*dt/sum(w)

        # Layer 1: input feature dim is 1, so Linear(1,50) is a broadcast scale + bias.
        h1 = jnp.maximum(x * w1 + b1, 0.0)                    # (B, HID)
        # Layer 2: one small MXU matmul against this expert's compact (50,50) weight.
        h2 = jnp.dot(h1, w2_ref[e], preferred_element_type=jnp.float32) + b2
        h2 = jnp.maximum(h2, 0.0)                             # (B, HID)
        # Layer 3 + weighted average + dt/sum(w) (folded into w3): multiply + lane reduce.
        y = y + jnp.sum(h2 * w3, axis=-1, keepdims=True)      # (B, 1)

    o_ref[...] = (y + bias_ref[0, 0]).astype(o_ref.dtype)


def pack_average_mu_params(w1s, b1s, w2s, b2s, w3s, b3s, weights, dt):
    """One-time packing of AverageMu parameters (hoisted OUT of the per-call hot path)."""
    weights = weights.astype(jnp.float32)
    w_scaled = weights * (jnp.float32(dt) / jnp.sum(weights))        # (n_mu,) = w_i*dt/sum(w)

    # Coalesce the four per-expert (1,HID) vectors into ONE (N_MU, 4, HID) array -> one DMA.
    p = jnp.stack(
        [
            w1s[:, 0, :].astype(jnp.float32),                        # row 0: W1
            b1s[:, 0, :].astype(jnp.float32),                        # row 1: b1
            b2s[:, 0, :].astype(jnp.float32),                        # row 2: b2
            w_scaled[:, None] * w3s[:, 0, :].astype(jnp.float32),    # row 3: scaled W3
        ],
        axis=1,
    )                                                                # (N_MU, 4, HID)

    w2 = w2s.astype(jnp.float32)                                     # compact (N_MU, HID, HID)

    # Fold all layer-3 biases + the dt/sum(w) scale into a single scalar (goes to SMEM).
    bias = jnp.sum(w_scaled * b3s[:, 0, 0].astype(jnp.float32)).reshape(1, 1)
    return jax.device_put(p), jax.device_put(w2), jax.device_put(bias)


@jax.jit
def average_mu_apply(x, params, w2, bias):
    """Hot path: single gridless pallas_call, everything resident in VMEM (+1 SMEM scalar)."""
    B = x.shape[0]
    vmem = pl.BlockSpec(memory_space=pltpu.MemorySpace.VMEM)
    smem = pl.BlockSpec(memory_space=pltpu.MemorySpace.SMEM)
    return pl.pallas_call(
        _average_mu_kernel,
        out_shape=jax.ShapeDtypeStruct((B, 1), jnp.float32),
        in_specs=[vmem, vmem, vmem, smem],
        out_specs=vmem,
    )(x.astype(jnp.float32), params, w2, bias)


def average_mu_reference(x, w1s, b1s, w2s, b2s, w3s, b3s, weights, dt):
    """Plain-JAX reference mirroring the PyTorch loop."""
    y = jnp.zeros((x.shape[0], 1), jnp.float32)
    for i in range(w1s.shape[0]):
        h1 = jnp.maximum(x @ w1s[i] + b1s[i, 0], 0.0)                # (B,50)
        h2 = jnp.maximum(h1 @ w2s[i] + b2s[i, 0], 0.0)               # (B,50)
        out = h2 @ w3s[i, 0][:, None] + b3s[i, 0]                    # (B,1)
        y = y + weights[i] * out
    return dt * y / jnp.sum(weights)


if __name__ == "__main__":
    key = jax.random.PRNGKey(0)
    B = 8  # batch of scalar states rho_t, input feature dim = 1

    keys = jax.random.split(key, 8)
    x = jax.random.uniform(keys[0], (B, 1), jnp.float32)

    # Deterministic parameter init (PyTorch-Linear-style uniform bounds).
    def init(k, shape, fan_in):
        bound = 1.0 / np.sqrt(fan_in)
        return jax.random.uniform(k, shape, jnp.float32, -bound, bound)

    w1s = init(keys[1], (N_MU, 1, HID), 1)        # Linear(1,50).weight^T stacked
    b1s = init(keys[2], (N_MU, 1, HID), 1)
    w2s = init(keys[3], (N_MU, HID, HID), HID)    # Linear(50,50).weight^T stacked
    b2s = init(keys[4], (N_MU, 1, HID), HID)
    w3s = init(keys[5], (N_MU, 1, HID), HID)      # Linear(50,1).weight stacked (already (1,50))
    b3s = init(keys[6], (N_MU, 1, 1), HID)
    weights = jax.random.uniform(keys[7], (N_MU,), jnp.float32, 0.5, 1.5)

    # One-time packing (NOT on the per-call hot path).
    params, w2c, bias = pack_average_mu_params(w1s, b1s, w2s, b2s, w3s, b3s, weights, DT)

    out = average_mu_apply(x, params, w2c, bias)
    out = jax.block_until_ready(out)

    ref = average_mu_reference(x, w1s, b1s, w2s, b2s, w3s, b3s, weights, DT)
    np.testing.assert_allclose(np.asarray(out), np.asarray(ref), rtol=1e-5, atol=1e-6)

    print("KERNEL_OK")
</pallas_src>

<mosaic_0001>
module attributes {stable_mosaic.version = 11 : i64} {
  func.func @_average_mu_kernel(%arg0: memref<8x1xf32, #tpu.memory_space<vmem>>, %arg1: memref<10x4x50xf32, #tpu.memory_space<vmem>>, %arg2: memref<10x50x50xf32, #tpu.memory_space<vmem>>, %arg3: memref<1x1xf32, #tpu.memory_space<smem>>, %arg4: memref<8x1xf32, #tpu.memory_space<vmem>>) attributes {dimension_semantics = [], scalar_prefetch = 0 : i64, scratch_operands = 0 : i64, tpu.core_type = #tpu.core_type<tc>} {
    %c0 = arith.constant 0 : index
    %c0_0 = arith.constant 0 : index
    %0 = vector.load %arg0[%c0, %c0_0] : memref<8x1xf32, #tpu.memory_space<vmem>>, vector<8x1xf32>
    %cst = arith.constant 0.000000e+00 : f32
    %1 = vector.broadcast %cst : f32 to vector<8x1xf32>
    %c0_1 = arith.constant 0 : index
    %c0_2 = arith.constant 0 : index
    %c0_3 = arith.constant 0 : index
    %2 = vector.load %arg1[%c0_1, %c0_2, %c0_3] : memref<10x4x50xf32, #tpu.memory_space<vmem>>, vector<1x1x50xf32>
    %3 = vector.shape_cast %2 : vector<1x1x50xf32> to vector<1x50xf32>
    %c0_4 = arith.constant 0 : index
    %c1 = arith.constant 1 : index
    %c0_5 = arith.constant 0 : index
    %4 = vector.load %arg1[%c0_4, %c1, %c0_5] : memref<10x4x50xf32, #tpu.memory_space<vmem>>, vector<1x1x50xf32>
    %5 = vector.shape_cast %4 : vector<1x1x50xf32> to vector<1x50xf32>
    %c0_6 = arith.constant 0 : index
    %c2 = arith.constant 2 : index
    %c0_7 = arith.constant 0 : index
    %6 = vector.load %arg1[%c0_6, %c2, %c0_7] : memref<10x4x50xf32, #tpu.memory_space<vmem>>, vector<1x1x50xf32>
    %7 = vector.shape_cast %6 : vector<1x1x50xf32> to vector<1x50xf32>
    %c0_8 = arith.constant 0 : index
    %c3 = arith.constant 3 : index
    %c0_9 = arith.constant 0 : index
    %8 = vector.load %arg1[%c0_8, %c3, %c0_9] : memref<10x4x50xf32, #tpu.memory_space<vmem>>, vector<1x1x50xf32>
    %9 = vector.shape_cast %8 : vector<1x1x50xf32> to vector<1x50xf32>
    %10 = vector.broadcast %0 : vector<8x1xf32> to vector<8x50xf32>
    %11 = vector.broadcast %3 : vector<1x50xf32> to vector<8x50xf32>
    %12 = arith.mulf %10, %11 : vector<8x50xf32>
    %13 = vector.broadcast %5 : vector<1x50xf32> to vector<8x50xf32>
    %14 = arith.addf %12, %13 : vector<8x50xf32>
    %cst_10 = arith.constant 0.000000e+00 : f32
    %15 = vector.broadcast %cst_10 : f32 to vector<8x50xf32>
    %16 = arith.maximumf %14, %15 : vector<8x50xf32>
    %c0_11 = arith.constant 0 : index
    %c0_12 = arith.constant 0 : index
    %c0_13 = arith.constant 0 : index
    %17 = vector.load %arg2[%c0_11, %c0_12, %c0_13] : memref<10x50x50xf32, #tpu.memory_space<vmem>>, vector<1x50x50xf32>
    %18 = vector.shape_cast %17 : vector<1x50x50xf32> to vector<50x50xf32>
    %cst_14 = arith.constant dense<0.000000e+00> : vector<8x50xf32>
    %19 = tpu.matmul %16, %18, %cst_14 {dimension_numbers = #tpu.dot_dimension_numbers<[1], [0], [0], [1], [0, 0, 1, 1], [], []>} : vector<8x50xf32>, vector<50x50xf32>, vector<8x50xf32> -> vector<8x50xf32>
    %20 = vector.broadcast %7 : vector<1x50xf32> to vector<8x50xf32>
    %21 = arith.addf %19, %20 : vector<8x50xf32>
    %cst_15 = arith.constant 0.000000e+00 : f32
    %22 = vector.broadcast %cst_15 : f32 to vector<8x50xf32>
    %23 = arith.maximumf %21, %22 : vector<8x50xf32>
    %24 = vector.broadcast %9 : vector<1x50xf32> to vector<8x50xf32>
    %25 = arith.mulf %23, %24 : vector<8x50xf32>
    %cst_16 = arith.constant dense<0.000000e+00> : vector<8xf32>
    %26 = vector.multi_reduction <add>, %25, %cst_16 [1] : vector<8x50xf32> to vector<8xf32>
    %27 = vector.shape_cast %26 : vector<8xf32> to vector<8x1xf32>
    %28 = arith.addf %1, %27 : vector<8x1xf32>
    %c1_17 = arith.constant 1 : index
    %c0_18 = arith.constant 0 : index
    %c0_19 = arith.constant 0 : index
    %29 = vector.load %arg1[%c1_17, %c0_18, %c0_19] : memref<10x4x50xf32, #tpu.memory_space<vmem>>, vector<1x1x50xf32>
    %30 = vector.shape_cast %29 : vector<1x1x50xf32> to vector<1x50xf32>
    %c1_20 = arith.constant 1 : index
    %c1_21 = arith.constant 1 : index
    %c0_22 = arith.constant 0 : index
    %31 = vector.load %arg1[%c1_20, %c1_21, %c0_22] : memref<10x4x50xf32, #tpu.memory_space<vmem>>, vector<1x1x50xf32>
    %32 = vector.shape_cast %31 : vector<1x1x50xf32> to vector<1x50xf32>
    %c1_23 = arith.constant 1 : index
    %c2_24 = arith.constant 2 : index
    %c0_25 = arith.constant 0 : index
    %33 = vector.load %arg1[%c1_23, %c2_24, %c0_25] : memref<10x4x50xf32, #tpu.memory_space<vmem>>, vector<1x1x50xf32>
    %34 = vector.shape_cast %33 : vector<1x1x50xf32> to vector<1x50xf32>
    %c1_26 = arith.constant 1 : index
    %c3_27 = arith.constant 3 : index
    %c0_28 = arith.constant 0 : index
    %35 = vector.load %arg1[%c1_26, %c3_27, %c0_28] : memref<10x4x50xf32, #tpu.memory_space<vmem>>, vector<1x1x50xf32>
    %36 = vector.shape_cast %35 : vector<1x1x50xf32> to vector<1x50xf32>
    %37 = vector.broadcast %0 : vector<8x1xf32> to vector<8x50xf32>
    %38 = vector.broadcast %30 : vector<1x50xf32> to vector<8x50xf32>
    %39 = arith.mulf %37, %38 : vector<8x50xf32>
    %40 = vector.broadcast %32 : vector<1x50xf32> to vector<8x50xf32>
    %41 = arith.addf %39, %40 : vector<8x50xf32>
    %cst_29 = arith.constant 0.000000e+00 : f32
    %42 = vector.broadcast %cst_29 : f32 to vector<8x50xf32>
    %43 = arith.maximumf %41, %42 : vector<8x50xf32>
    %c1_30 = arith.constant 1 : index
    %c0_31 = arith.constant 0 : index
    %c0_32 = arith.constant 0 : index
    %44 = vector.load %arg2[%c1_30, %c0_31, %c0_32] : memref<10x50x50xf32, #tpu.memory_space<vmem>>, vector<1x50x50xf32>
    %45 = vector.shape_cast %44 : vector<1x50x50xf32> to vector<50x50xf32>
    %cst_33 = arith.constant dense<0.000000e+00> : vector<8x50xf32>
    %46 = tpu.matmul %43, %45, %cst_33 {dimension_numbers = #tpu.dot_dimension_numbers<[1], [0], [0], [1], [0, 0, 1, 1], [], []>} : vector<8x50xf32>, vector<50x50xf32>, vector<8x50xf32> -> vector<8x50xf32>
    %47 = vector.broadcast %34 : vector<1x50xf32> to vector<8x50xf32>
    %48 = arith.addf %46, %47 : vector<8x50xf32>
    %cst_34 = arith.constant 0.000000e+00 : f32
    %49 = vector.broadcast %cst_34 : f32 to vector<8x50xf32>
    %50 = arith.maximumf %48, %49 : vector<8x50xf32>
    %51 = vector.broadcast %36 : vector<1x50xf32> to vector<8x50xf32>
    %52 = arith.mulf %50, %51 : vector<8x50xf32>
    %cst_35 = arith.constant dense<0.000000e+00> : vector<8xf32>
    %53 = vector.multi_reduction <add>, %52, %cst_35 [1] : vector<8x50xf32> to vector<8xf32>
    %54 = vector.shape_cast %53 : vector<8xf32> to vector<8x1xf32>
    %55 = arith.addf %28, %54 : vector<8x1xf32>
    %c2_36 = arith.constant 2 : index
    %c0_37 = arith.constant 0 : index
    %c0_38 = arith.constant 0 : index
    %56 = vector.load %arg1[%c2_36, %c0_37, %c0_38] : memref<10x4x50xf32, #tpu.memory_space<vmem>>, vector<1x1x50xf32>
    %57 = vector.shape_cast %56 : vector<1x1x50xf32> to vector<1x50xf32>
    %c2_39 = arith.constant 2 : index
    %c1_40 = arith.constant 1 : index
    %c0_41 = arith.constant 0 : index
    %58 = vector.load %arg1[%c2_39, %c1_40, %c0_41] : memref<10x4x50xf32, #tpu.memory_space<vmem>>, vector<1x1x50xf32>
    %59 = vector.shape_cast %58 : vector<1x1x50xf32> to vector<1x50xf32>
    %c2_42 = arith.constant 2 : index
    %c2_43 = arith.constant 2 : index
    %c0_44 = arith.constant 0 : index
    %60 = vector.load %arg1[%c2_42, %c2_43, %c0_44] : memref<10x4x50xf32, #tpu.memory_space<vmem>>, vector<1x1x50xf32>
    %61 = vector.shape_cast %60 : vector<1x1x50xf32> to vector<1x50xf32>
    %c2_45 = arith.constant 2 : index
    %c3_46 = arith.constant 3 : index
    %c0_47 = arith.constant 0 : index
    %62 = vector.load %arg1[%c2_45, %c3_46, %c0_47] : memref<10x4x50xf32, #tpu.memory_space<vmem>>, vector<1x1x50xf32>
    %63 = vector.shape_cast %62 : vector<1x1x50xf32> to vector<1x50xf32>
    %64 = vector.broadcast %0 : vector<8x1xf32> to vector<8x50xf32>
    %65 = vector.broadcast %57 : vector<1x50xf32> to vector<8x50xf32>
    %66 = arith.mulf %64, %65 : vector<8x50xf32>
    %67 = vector.broadcast %59 : vector<1x50xf32> to vector<8x50xf32>
    %68 = arith.addf %66, %67 : vector<8x50xf32>
    %cst_48 = arith.constant 0.000000e+00 : f32
    %69 = vector.broadcast %cst_48 : f32 to vector<8x50xf32>
    %70 = arith.maximumf %68, %69 : vector<8x50xf32>
    %c2_49 = arith.constant 2 : index
    %c0_50 = arith.constant 0 : index
    %c0_51 = arith.constant 0 : index
    %71 = vector.load %arg2[%c2_49, %c0_50, %c0_51] : memref<10x50x50xf32, #tpu.memory_space<vmem>>, vector<1x50x50xf32>
    %72 = vector.shape_cast %71 : vector<1x50x50xf32> to vector<50x50xf32>
    %cst_52 = arith.constant dense<0.000000e+00> : vector<8x50xf32>
    %73 = tpu.matmul %70, %72, %cst_52 {dimension_numbers = #tpu.dot_dimension_numbers<[1], [0], [0], [1], [0, 0, 1, 1], [], []>} : vector<8x50xf32>, vector<50x50xf32>, vector<8x50xf32> -> vector<8x50xf32>
    %74 = vector.broadcast %61 : vector<1x50xf32> to vector<8x50xf32>
    %75 = arith.addf %73, %74 : vector<8x50xf32>
    %cst_53 = arith.constant 0.000000e+00 : f32
    %76 = vector.broadcast %cst_53 : f32 to vector<8x50xf32>
    %77 = arith.maximumf %75, %76 : vector<8x50xf32>
    %78 = vector.broadcast %63 : vector<1x50xf32> to vector<8x50xf32>
    %79 = arith.mulf %77, %78 : vector<8x50xf32>
    %cst_54 = arith.constant dense<0.000000e+00> : vector<8xf32>
    %80 = vector.multi_reduction <add>, %79, %cst_54 [1] : vector<8x50xf32> to vector<8xf32>
    %81 = vector.shape_cast %80 : vector<8xf32> to vector<8x1xf32>
    %82 = arith.addf %55, %81 : vector<8x1xf32>
    %c3_55 = arith.constant 3 : index
    %c0_56 = arith.constant 0 : index
    %c0_57 = arith.constant 0 : index
    %83 = vector.load %arg1[%c3_55, %c0_56, %c0_57] : memref<10x4x50xf32, #tpu.memory_space<vmem>>, vector<1x1x50xf32>
    %84 = vector.shape_cast %83 : vector<1x1x50xf32> to vector<1x50xf32>
    %c3_58 = arith.constant 3 : index
    %c1_59 = arith.constant 1 : index
    %c0_60 = arith.constant 0 : index
    %85 = vector.load %arg1[%c3_58, %c1_59, %c0_60] : memref<10x4x50xf32, #tpu.memory_space<vmem>>, vector<1x1x50xf32>
    %86 = vector.shape_cast %85 : vector<1x1x50xf32> to vector<1x50xf32>
    %c3_61 = arith.constant 3 : index
    %c2_62 = arith.constant 2 : index
    %c0_63 = arith.constant 0 : index
    %87 = vector.load %arg1[%c3_61, %c2_62, %c0_63] : memref<10x4x50xf32, #tpu.memory_space<vmem>>, vector<1x1x50xf32>
    %88 = vector.shape_cast %87 : vector<1x1x50xf32> to vector<1x50xf32>
    %c3_64 = arith.constant 3 : index
    %c3_65 = arith.constant 3 : index
    %c0_66 = arith.constant 0 : index
    %89 = vector.load %arg1[%c3_64, %c3_65, %c0_66] : memref<10x4x50xf32, #tpu.memory_space<vmem>>, vector<1x1x50xf32>
    %90 = vector.shape_cast %89 : vector<1x1x50xf32> to vector<1x50xf32>
    %91 = vector.broadcast %0 : vector<8x1xf32> to vector<8x50xf32>
    %92 = vector.broadcast %84 : vector<1x50xf32> to vector<8x50xf32>
    %93 = arith.mulf %91, %92 : vector<8x50xf32>
    %94 = vector.broadcast %86 : vector<1x50xf32> to vector<8x50xf32>
    %95 = arith.addf %93, %94 : vector<8x50xf32>
    %cst_67 = arith.constant 0.000000e+00 : f32
    %96 = vector.broadcast %cst_67 : f32 to vector<8x50xf32>
    %97 = arith.maximumf %95, %96 : vector<8x50xf32>
    %c3_68 = arith.constant 3 : index
    %c0_69 = arith.constant 0 : index
    %c0_70 = arith.constant 0 : index
    %98 = vector.load %arg2[%c3_68, %c0_69, %c0_70] : memref<10x50x50xf32, #tpu.memory_space<vmem>>, vector<1x50x50xf32>
    %99 = vector.shape_cast %98 : vector<1x50x50xf32> to vector<50x50xf32>
    %cst_71 = arith.constant dense<0.000000e+00> : vector<8x50xf32>
    %100 = tpu.matmul %97, %99, %cst_71 {dimension_numbers = #tpu.dot_dimension_numbers<[1], [0], [0], [1], [0, 0, 1, 1], [], []>} : vector<8x50xf32>, vector<50x50xf32>, vector<8x50xf32> -> vector<8x50xf32>
    %101 = vector.broadcast %88 : vector<1x50xf32> to vector<8x50xf32>
    %102 = arith.addf %100, %101 : vector<8x50xf32>
    %cst_72 = arith.constant 0.000000e+00 : f32
    %103 = vector.broadcast %cst_72 : f32 to vector<8x50xf32>
    %104 = arith.maximumf %102, %103 : vector<8x50xf32>
    %105 = vector.broadcast %90 : vector<1x50xf32> to vector<8x50xf32>
    %106 = arith.mulf %104, %105 : vector<8x50xf32>
    %cst_73 = arith.constant dense<0.000000e+00> : vector<8xf32>
    %107 = vector.multi_reduction <add>, %106, %cst_73 [1] : vector<8x50xf32> to vector<8xf32>
    %108 = vector.shape_cast %107 : vector<8xf32> to vector<8x1xf32>
    %109 = arith.addf %82, %108 : vector<8x1xf32>
    %c4 = arith.constant 4 : index
    %c0_74 = arith.constant 0 : index
    %c0_75 = arith.constant 0 : index
    %110 = vector.load %arg1[%c4, %c0_74, %c0_75] : memref<10x4x50xf32, #tpu.memory_space<vmem>>, vector<1x1x50xf32>
    %111 = vector.shape_cast %110 : vector<1x1x50xf32> to vector<1x50xf32>
    %c4_76 = arith.constant 4 : index
    %c1_77 = arith.constant 1 : index
    %c0_78 = arith.constant 0 : index
    %112 = vector.load %arg1[%c4_76, %c1_77, %c0_78] : memref<10x4x50xf32, #tpu.memory_space<vmem>>, vector<1x1x50xf32>
    %113 = vector.shape_cast %112 : vector<1x1x50xf32> to vector<1x50xf32>
    %c4_79 = arith.constant 4 : index
    %c2_80 = arith.constant 2 : index
    %c0_81 = arith.constant 0 : index
    %114 = vector.load %arg1[%c4_79, %c2_80, %c0_81] : memref<10x4x50xf32, #tpu.memory_space<vmem>>, vector<1x1x50xf32>
    %115 = vector.shape_cast %114 : vector<1x1x50xf32> to vector<1x50xf32>
    %c4_82 = arith.constant 4 : index
    %c3_83 = arith.constant 3 : index
    %c0_84 = arith.constant 0 : index
    %116 = vector.load %arg1[%c4_82, %c3_83, %c0_84] : memref<10x4x50xf32, #tpu.memory_space<vmem>>, vector<1x1x50xf32>
    %117 = vector.shape_cast %116 : vector<1x1x50xf32> to vector<1x50xf32>
    %118 = vector.broadcast %0 : vector<8x1xf32> to vector<8x50xf32>
    %119 = vector.broadcast %111 : vector<1x50xf32> to vector<8x50xf32>
    %120 = arith.mulf %118, %119 : vector<8x50xf32>
    %121 = vector.broadcast %113 : vector<1x50xf32> to vector<8x50xf32>
    %122 = arith.addf %120, %121 : vector<8x50xf32>
    %cst_85 = arith.constant 0.000000e+00 : f32
    %123 = vector.broadcast %cst_85 : f32 to vector<8x50xf32>
    %124 = arith.maximumf %122, %123 : vector<8x50xf32>
    %c4_86 = arith.constant 4 : index
    %c0_87 = arith.constant 0 : index
    %c0_88 = arith.constant 0 : index
    %125 = vector.load %arg2[%c4_86, %c0_87, %c0_88] : memref<10x50x50xf32, #tpu.memory_space<vmem>>, vector<1x50x50xf32>
    %126 = vector.shape_cast %125 : vector<1x50x50xf32> to vector<50x50xf32>
    %cst_89 = arith.constant dense<0.000000e+00> : vector<8x50xf32>
    %127 = tpu.matmul %124, %126, %cst_89 {dimension_numbers = #tpu.dot_dimension_numbers<[1], [0], [0], [1], [0, 0, 1, 1], [], []>} : vector<8x50xf32>, vector<50x50xf32>, vector<8x50xf32> -> vector<8x50xf32>
    %128 = vector.broadcast %115 : vector<1x50xf32> to vector<8x50xf32>
    %129 = arith.addf %127, %128 : vector<8x50xf32>
    %cst_90 = arith.constant 0.000000e+00 : f32
    %130 = vector.broadcast %cst_90 : f32 to vector<8x50xf32>
    %131 = arith.maximumf %129, %130 : vector<8x50xf32>
    %132 = vector.broadcast %117 : vector<1x50xf32> to vector<8x50xf32>
    %133 = arith.mulf %131, %132 : vector<8x50xf32>
    %cst_91 = arith.constant dense<0.000000e+00> : vector<8xf32>
    %134 = vector.multi_reduction <add>, %133, %cst_91 [1] : vector<8x50xf32> to vector<8xf32>
    %135 = vector.shape_cast %134 : vector<8xf32> to vector<8x1xf32>
    %136 = arith.addf %109, %135 : vector<8x1xf32>
    %c5 = arith.constant 5 : index
    %c0_92 = arith.constant 0 : index
    %c0_93 = arith.constant 0 : index
    %137 = vector.load %arg1[%c5, %c0_92, %c0_93] : memref<10x4x50xf32, #tpu.memory_space<vmem>>, vector<1x1x50xf32>
    %138 = vector.shape_cast %137 : vector<1x1x50xf32> to vector<1x50xf32>
    %c5_94 = arith.constant 5 : index
    %c1_95 = arith.constant 1 : index
    %c0_96 = arith.constant 0 : index
    %139 = vector.load %arg1[%c5_94, %c1_95, %c0_96] : memref<10x4x50xf32, #tpu.memory_space<vmem>>, vector<1x1x50xf32>
    %140 = vector.shape_cast %139 : vector<1x1x50xf32> to vector<1x50xf32>
    %c5_97 = arith.constant 5 : index
    %c2_98 = arith.constant 2 : index
    %c0_99 = arith.constant 0 : index
    %141 = vector.load %arg1[%c5_97, %c2_98, %c0_99] : memref<10x4x50xf32, #tpu.memory_space<vmem>>, vector<1x1x50xf32>
    %142 = vector.shape_cast %141 : vector<1x1x50xf32> to vector<1x50xf32>
    %c5_100 = arith.constant 5 : index
    %c3_101 = arith.constant 3 : index
    %c0_102 = arith.constant 0 : index
    %143 = vector.load %arg1[%c5_100, %c3_101, %c0_102] : memref<10x4x50xf32, #tpu.memory_space<vmem>>, vector<1x1x50xf32>
    %144 = vector.shape_cast %143 : vector<1x1x50xf32> to vector<1x50xf32>
    %145 = vector.broadcast %0 : vector<8x1xf32> to vector<8x50xf32>
    %146 = vector.broadcast %138 : vector<1x50xf32> to vector<8x50xf32>
    %147 = arith.mulf %145, %146 : vector<8x50xf32>
    %148 = vector.broadcast %140 : vector<1x50xf32> to vector<8x50xf32>
    %149 = arith.addf %147, %148 : vector<8x50xf32>
    %cst_103 = arith.constant 0.000000e+00 : f32
    %150 = vector.broadcast %cst_103 : f32 to vector<8x50xf32>
    %151 = arith.maximumf %149, %150 : vector<8x50xf32>
    %c5_104 = arith.constant 5 : index
    %c0_105 = arith.constant 0 : index
    %c0_106 = arith.constant 0 : index
    %152 = vector.load %arg2[%c5_104, %c0_105, %c0_106] : memref<10x50x50xf32, #tpu.memory_space<vmem>>, vector<1x50x50xf32>
    %153 = vector.shape_cast %152 : vector<1x50x50xf32> to vector<50x50xf32>
    %cst_107 = arith.constant dense<0.000000e+00> : vector<8x50xf32>
    %154 = tpu.matmul %151, %153, %cst_107 {dimension_numbers = #tpu.dot_dimension_numbers<[1], [0], [0], [1], [0, 0, 1, 1], [], []>} : vector<8x50xf32>, vector<50x50xf32>, vector<8x50xf32> -> vector<8x50xf32>
    %155 = vector.broadcast %142 : vector<1x50xf32> to vector<8x50xf32>
    %156 = arith.addf %154, %155 : vector<8x50xf32>
    %cst_108 = arith.constant 0.000000e+00 : f32
    %157 = vector.broadcast %cst_108 : f32 to vector<8x50xf32>
    %158 = arith.maximumf %156, %157 : vector<8x50xf32>
    %159 = vector.broadcast %144 : vector<1x50xf32> to vector<8x50xf32>
    %160 = arith.mulf %158, %159 : vector<8x50xf32>
    %cst_109 = arith.constant dense<0.000000e+00> : vector<8xf32>
    %161 = vector.multi_reduction <add>, %160, %cst_109 [1] : vector<8x50xf32> to vector<8xf32>
    %162 = vector.shape_cast %161 : vector<8xf32> to vector<8x1xf32>
    %163 = arith.addf %136, %162 : vector<8x1xf32>
    %c6 = arith.constant 6 : index
    %c0_110 = arith.constant 0 : index
    %c0_111 = arith.constant 0 : index
    %164 = vector.load %arg1[%c6, %c0_110, %c0_111] : memref<10x4x50xf32, #tpu.memory_space<vmem>>, vector<1x1x50xf32>
    %165 = vector.shape_cast %164 : vector<1x1x50xf32> to vector<1x50xf32>
    %c6_112 = arith.constant 6 : index
    %c1_113 = arith.constant 1 : index
    %c0_114 = arith.constant 0 : index
    %166 = vector.load %arg1[%c6_112, %c1_113, %c0_114] : memref<10x4x50xf32, #tpu.memory_space<vmem>>, vector<1x1x50xf32>
    %167 = vector.shape_cast %166 : vector<1x1x50xf32> to vector<1x50xf32>
    %c6_115 = arith.constant 6 : index
    %c2_116 = arith.constant 2 : index
    %c0_117 = arith.constant 0 : index
    %168 = vector.load %arg1[%c6_115, %c2_116, %c0_117] : memref<10x4x50xf32, #tpu.memory_space<vmem>>, vector<1x1x50xf32>
    %169 = vector.shape_cast %168 : vector<1x1x50xf32> to vector<1x50xf32>
    %c6_118 = arith.constant 6 : index
    %c3_119 = arith.constant 3 : index
    %c0_120 = arith.constant 0 : index
    %170 = vector.load %arg1[%c6_118, %c3_119, %c0_120] : memref<10x4x50xf32, #tpu.memory_space<vmem>>, vector<1x1x50xf32>
    %171 = vector.shape_cast %170 : vector<1x1x50xf32> to vector<1x50xf32>
    %172 = vector.broadcast %0 : vector<8x1xf32> to vector<8x50xf32>
    %173 = vector.broadcast %165 : vector<1x50xf32> to vector<8x50xf32>
    %174 = arith.mulf %172, %173 : vector<8x50xf32>
    %175 = vector.broadcast %167 : vector<1x50xf32> to vector<8x50xf32>
    %176 = arith.addf %174, %175 : vector<8x50xf32>
    %cst_121 = arith.constant 0.000000e+00 : f32
    %177 = vector.broadcast %cst_121 : f32 to vector<8x50xf32>
    %178 = arith.maximumf %176, %177 : vector<8x50xf32>
    %c6_122 = arith.constant 6 : index
    %c0_123 = arith.constant 0 : index
    %c0_124 = arith.constant 0 : index
    %179 = vector.load %arg2[%c6_122, %c0_123, %c0_124] : memref<10x50x50xf32, #tpu.memory_space<vmem>>, vector<1x50x50xf32>
    %180 = vector.shape_cast %179 : vector<1x50x50xf32> to vector<50x50xf32>
    %cst_125 = arith.constant dense<0.000000e+00> : vector<8x50xf32>
    %181 = tpu.matmul %178, %180, %cst_125 {dimension_numbers = #tpu.dot_dimension_numbers<[1], [0], [0], [1], [0, 0, 1, 1], [], []>} : vector<8x50xf32>, vector<50x50xf32>, vector<8x50xf32> -> vector<8x50xf32>
    %182 = vector.broadcast %169 : vector<1x50xf32> to vector<8x50xf32>
    %183 = arith.addf %181, %182 : vector<8x50xf32>
    %cst_126 = arith.constant 0.000000e+00 : f32
    %184 = vector.broadcast %cst_126 : f32 to vector<8x50xf32>
    %185 = arith.maximumf %183, %184 : vector<8x50xf32>
    %186 = vector.broadcast %171 : vector<1x50xf32> to vector<8x50xf32>
    %187 = arith.mulf %185, %186 : vector<8x50xf32>
    %cst_127 = arith.constant dense<0.000000e+00> : vector<8xf32>
    %188 = vector.multi_reduction <add>, %187, %cst_127 [1] : vector<8x50xf32> to vector<8xf32>
    %189 = vector.shape_cast %188 : vector<8xf32> to vector<8x1xf32>
    %190 = arith.addf %163, %189 : vector<8x1xf32>
    %c7 = arith.constant 7 : index
    %c0_128 = arith.constant 0 : index
    %c0_129 = arith.constant 0 : index
    %191 = vector.load %arg1[%c7, %c0_128, %c0_129] : memref<10x4x50xf32, #tpu.memory_space<vmem>>, vector<1x1x50xf32>
    %192 = vector.shape_cast %191 : vector<1x1x50xf32> to vector<1x50xf32>
    %c7_130 = arith.constant 7 : index
    %c1_131 = arith.constant 1 : index
    %c0_132 = arith.constant 0 : index
    %193 = vector.load %arg1[%c7_130, %c1_131, %c0_132] : memref<10x4x50xf32, #tpu.memory_space<vmem>>, vector<1x1x50xf32>
    %194 = vector.shape_cast %193 : vector<1x1x50xf32> to vector<1x50xf32>
    %c7_133 = arith.constant 7 : index
    %c2_134 = arith.constant 2 : index
    %c0_135 = arith.constant 0 : index
    %195 = vector.load %arg1[%c7_133, %c2_134, %c0_135] : memref<10x4x50xf32, #tpu.memory_space<vmem>>, vector<1x1x50xf32>
    %196 = vector.shape_cast %195 : vector<1x1x50xf32> to vector<1x50xf32>
    %c7_136 = arith.constant 7 : index
    %c3_137 = arith.constant 3 : index
    %c0_138 = arith.constant 0 : index
    %197 = vector.load %arg1[%c7_136, %c3_137, %c0_138] : memref<10x4x50xf32, #tpu.memory_space<vmem>>, vector<1x1x50xf32>
    %198 = vector.shape_cast %197 : vector<1x1x50xf32> to vector<1x50xf32>
    %199 = vector.broadcast %0 : vector<8x1xf32> to vector<8x50xf32>
    %200 = vector.broadcast %192 : vector<1x50xf32> to vector<8x50xf32>
    %201 = arith.mulf %199, %200 : vector<8x50xf32>
    %202 = vector.broadcast %194 : vector<1x50xf32> to vector<8x50xf32>
    %203 = arith.addf %201, %202 : vector<8x50xf32>
    %cst_139 = arith.constant 0.000000e+00 : f32
    %204 = vector.broadcast %cst_139 : f32 to vector<8x50xf32>
    %205 = arith.maximumf %203, %204 : vector<8x50xf32>
    %c7_140 = arith.constant 7 : index
    %c0_141 = arith.constant 0 : index
    %c0_142 = arith.constant 0 : index
    %206 = vector.load %arg2[%c7_140, %c0_141, %c0_142] : memref<10x50x50xf32, #tpu.memory_space<vmem>>, vector<1x50x50xf32>
    %207 = vector.shape_cast %206 : vector<1x50x50xf32> to vector<50x50xf32>
    %cst_143 = arith.constant dense<0.000000e+00> : vector<8x50xf32>
    %208 = tpu.matmul %205, %207, %cst_143 {dimension_numbers = #tpu.dot_dimension_numbers<[1], [0], [0], [1], [0, 0, 1, 1], [], []>} : vector<8x50xf32>, vector<50x50xf32>, vector<8x50xf32> -> vector<8x50xf32>
    %209 = vector.broadcast %196 : vector<1x50xf32> to vector<8x50xf32>
    %210 = arith.addf %208, %209 : vector<8x50xf32>
    %cst_144 = arith.constant 0.000000e+00 : f32
    %211 = vector.broadcast %cst_144 : f32 to vector<8x50xf32>
    %212 = arith.maximumf %210, %211 : vector<8x50xf32>
    %213 = vector.broadcast %198 : vector<1x50xf32> to vector<8x50xf32>
    %214 = arith.mulf %212, %213 : vector<8x50xf32>
    %cst_145 = arith.constant dense<0.000000e+00> : vector<8xf32>
    %215 = vector.multi_reduction <add>, %214, %cst_145 [1] : vector<8x50xf32> to vector<8xf32>
    %216 = vector.shape_cast %215 : vector<8xf32> to vector<8x1xf32>
    %217 = arith.addf %190, %216 : vector<8x1xf32>
    %c8 = arith.constant 8 : index
    %c0_146 = arith.constant 0 : index
    %c0_147 = arith.constant 0 : index
    %218 = vector.load %arg1[%c8, %c0_146, %c0_147] : memref<10x4x50xf32, #tpu.memory_space<vmem>>, vector<1x1x50xf32>
    %219 = vector.shape_cast %218 : vector<1x1x50xf32> to vector<1x50xf32>
    %c8_148 = arith.constant 8 : index
    %c1_149 = arith.constant 1 : index
    %c0_150 = arith.constant 0 : index
    %220 = vector.load %arg1[%c8_148, %c1_149, %c0_150] : memref<10x4x50xf32, #tpu.memory_space<vmem>>, vector<1x1x50xf32>
    %221 = vector.shape_cast %220 : vector<1x1x50xf32> to vector<1x50xf32>
    %c8_151 = arith.constant 8 : index
    %c2_152 = arith.constant 2 : index
    %c0_153 = arith.constant 0 : index
    %222 = vector.load %arg1[%c8_151, %c2_152, %c0_153] : memref<10x4x50xf32, #tpu.memory_space<vmem>>, vector<1x1x50xf32>
    %223 = vector.shape_cast %222 : vector<1x1x50xf32> to vector<1x50xf32>
    %c8_154 = arith.constant 8 : index
    %c3_155 = arith.constant 3 : index
    %c0_156 = arith.constant 0 : index
    %224 = vector.load %arg1[%c8_154, %c3_155, %c0_156] : memref<10x4x50xf32, #tpu.memory_space<vmem>>, vector<1x1x50xf32>
    %225 = vector.shape_cast %224 : vector<1x1x50xf32> to vector<1x50xf32>
    %226 = vector.broadcast %0 : vector<8x1xf32> to vector<8x50xf32>
    %227 = vector.broadcast %219 : vector<1x50xf32> to vector<8x50xf32>
    %228 = arith.mulf %226, %227 : vector<8x50xf32>
    %229 = vector.broadcast %221 : vector<1x50xf32> to vector<8x50xf32>
    %230 = arith.addf %228, %229 : vector<8x50xf32>
    %cst_157 = arith.constant 0.000000e+00 : f32
    %231 = vector.broadcast %cst_157 : f32 to vector<8x50xf32>
    %232 = arith.maximumf %230, %231 : vector<8x50xf32>
    %c8_158 = arith.constant 8 : index
    %c0_159 = arith.constant 0 : index
    %c0_160 = arith.constant 0 : index
    %233 = vector.load %arg2[%c8_158, %c0_159, %c0_160] : memref<10x50x50xf32, #tpu.memory_space<vmem>>, vector<1x50x50xf32>
    %234 = vector.shape_cast %233 : vector<1x50x50xf32> to vector<50x50xf32>
    %cst_161 = arith.constant dense<0.000000e+00> : vector<8x50xf32>
    %235 = tpu.matmul %232, %234, %cst_161 {dimension_numbers = #tpu.dot_dimension_numbers<[1], [0], [0], [1], [0, 0, 1, 1], [], []>} : vector<8x50xf32>, vector<50x50xf32>, vector<8x50xf32> -> vector<8x50xf32>
    %236 = vector.broadcast %223 : vector<1x50xf32> to vector<8x50xf32>
    %237 = arith.addf %235, %236 : vector<8x50xf32>
    %cst_162 = arith.constant 0.000000e+00 : f32
    %238 = vector.broadcast %cst_162 : f32 to vector<8x50xf32>
    %239 = arith.maximumf %237, %238 : vector<8x50xf32>
    %240 = vector.broadcast %225 : vector<1x50xf32> to vector<8x50xf32>
    %241 = arith.mulf %239, %240 : vector<8x50xf32>
    %cst_163 = arith.constant dense<0.000000e+00> : vector<8xf32>
    %242 = vector.multi_reduction <add>, %241, %cst_163 [1] : vector<8x50xf32> to vector<8xf32>
    %243 = vector.shape_cast %242 : vector<8xf32> to vector<8x1xf32>
    %244 = arith.addf %217, %243 : vector<8x1xf32>
    %c9 = arith.constant 9 : index
    %c0_164 = arith.constant 0 : index
    %c0_165 = arith.constant 0 : index
    %245 = vector.load %arg1[%c9, %c0_164, %c0_165] : memref<10x4x50xf32, #tpu.memory_space<vmem>>, vector<1x1x50xf32>
    %246 = vector.shape_cast %245 : vector<1x1x50xf32> to vector<1x50xf32>
    %c9_166 = arith.constant 9 : index
    %c1_167 = arith.constant 1 : index
    %c0_168 = arith.constant 0 : index
    %247 = vector.load %arg1[%c9_166, %c1_167, %c0_168] : memref<10x4x50xf32, #tpu.memory_space<vmem>>, vector<1x1x50xf32>
    %248 = vector.shape_cast %247 : vector<1x1x50xf32> to vector<1x50xf32>
    %c9_169 = arith.constant 9 : index
    %c2_170 = arith.constant 2 : index
    %c0_171 = arith.constant 0 : index
    %249 = vector.load %arg1[%c9_169, %c2_170, %c0_171] : memref<10x4x50xf32, #tpu.memory_space<vmem>>, vector<1x1x50xf32>
    %250 = vector.shape_cast %249 : vector<1x1x50xf32> to vector<1x50xf32>
    %c9_172 = arith.constant 9 : index
    %c3_173 = arith.constant 3 : index
    %c0_174 = arith.constant 0 : index
    %251 = vector.load %arg1[%c9_172, %c3_173, %c0_174] : memref<10x4x50xf32, #tpu.memory_space<vmem>>, vector<1x1x50xf32>
    %252 = vector.shape_cast %251 : vector<1x1x50xf32> to vector<1x50xf32>
    %253 = vector.broadcast %0 : vector<8x1xf32> to vector<8x50xf32>
    %254 = vector.broadcast %246 : vector<1x50xf32> to vector<8x50xf32>
    %255 = arith.mulf %253, %254 : vector<8x50xf32>
    %256 = vector.broadcast %248 : vector<1x50xf32> to vector<8x50xf32>
    %257 = arith.addf %255, %256 : vector<8x50xf32>
    %cst_175 = arith.constant 0.000000e+00 : f32
    %258 = vector.broadcast %cst_175 : f32 to vector<8x50xf32>
    %259 = arith.maximumf %257, %258 : vector<8x50xf32>
    %c9_176 = arith.constant 9 : index
    %c0_177 = arith.constant 0 : index
    %c0_178 = arith.constant 0 : index
    %260 = vector.load %arg2[%c9_176, %c0_177, %c0_178] : memref<10x50x50xf32, #tpu.memory_space<vmem>>, vector<1x50x50xf32>
    %261 = vector.shape_cast %260 : vector<1x50x50xf32> to vector<50x50xf32>
    %cst_179 = arith.constant dense<0.000000e+00> : vector<8x50xf32>
    %262 = tpu.matmul %259, %261, %cst_179 {dimension_numbers = #tpu.dot_dimension_numbers<[1], [0], [0], [1], [0, 0, 1, 1], [], []>} : vector<8x50xf32>, vector<50x50xf32>, vector<8x50xf32> -> vector<8x50xf32>
    %263 = vector.broadcast %250 : vector<1x50xf32> to vector<8x50xf32>
    %264 = arith.addf %262, %263 : vector<8x50xf32>
    %cst_180 = arith.constant 0.000000e+00 : f32
    %265 = vector.broadcast %cst_180 : f32 to vector<8x50xf32>
    %266 = arith.maximumf %264, %265 : vector<8x50xf32>
    %267 = vector.broadcast %252 : vector<1x50xf32> to vector<8x50xf32>
    %268 = arith.mulf %266, %267 : vector<8x50xf32>
    %cst_181 = arith.constant dense<0.000000e+00> : vector<8xf32>
    %269 = vector.multi_reduction <add>, %268, %cst_181 [1] : vector<8x50xf32> to vector<8xf32>
    %270 = vector.shape_cast %269 : vector<8xf32> to vector<8x1xf32>
    %271 = arith.addf %244, %270 : vector<8x1xf32>
    %c0_182 = arith.constant 0 : index
    %c0_183 = arith.constant 0 : index
    %272 = memref.load %arg3[%c0_182, %c0_183] : memref<1x1xf32, #tpu.memory_space<smem>>
    %273 = vector.broadcast %272 : f32 to vector<8x1xf32>
    %274 = arith.addf %271, %273 : vector<8x1xf32>
    %c0_184 = arith.constant 0 : index
    %c0_185 = arith.constant 0 : index
    %275 = vector.load %arg4[%c0_184, %c0_185] : memref<8x1xf32, #tpu.memory_space<vmem>>, vector<8x1xf32>
    tpu.vector_store %arg4[%c0_184, %c0_185], %274 {strides = array<i32>} : memref<8x1xf32, #tpu.memory_space<vmem>>, vector<8x1xf32>,
    return
  }
}

</mosaic_0001>

<llo_original>
// kernel: average_mu_apply.1
$region0: #{average_mu_apply.1}
  #allocation0 [shape = 'u32[]', space=smem, size = 0x4, offset = 0x4, fixed_abs, tag = 'smem constant byte address 0x4 - core index']
  #allocation1 [shape = 'u32[144,128]{1,0:T(1,128)}', space=vmem, size = 0x12000, scoped, tag = 'internal scratch']
  #allocation2 [shape = 'f32[1,1]{1,0:T(1,128)S(6)}', space=smem, size = 0x200, scoped, tag = 'scoped memory for average_mu_apply.1']
  %s0 = inlined_call_operand.vmem [shape: f32[8,1], index: 0, kind: input, shape index: {}]
  %s1 = inlined_call_operand.hbm [shape: f32[10,4,50], index: 1, kind: input, shape index: {}]
  %s2 = inlined_call_operand.hbm [shape: f32[10,50,50], index: 2, kind: input, shape index: {}]
  %s3 = inlined_call_operand.<no memory space> [shape: f32[1,1], index: 3, kind: input, shape index: {}]
  %s4 = inlined_call_operand.vmem [shape: f32[8,1], index: 4, kind: output, shape index: {}]
  %s5 = sld [smem:[#allocation0]]
  $region34: #{average_mu_apply.1} parent=0
    _
  %s7 = ssub.s32 1, %s5
  %s8 = scalar_select 0, %s7, %s5
  %9 = sst [smem:[#allocation2]] %s3
  $region1: #{average_mu_apply.1} parent=0
    #allocation3 [shape = 'u8[20480]{0}', space=vmem, size = 0x5000, scoped, tag = 'input window, operand 1, single buffered']
    #allocation4 [shape = 's32[1]{0}', space=sflag, size = 0x4, scoped, tag = 'scoped memory for average_mu_apply.1']
    #allocation5 [shape = 'u8[286720]{0}', space=vmem, size = 0x46000, scoped, tag = 'input window, operand 2, single buffered']
    #allocation6 [shape = 's32[1]{0}', space=sflag, size = 0x4, scoped, tag = 'scoped memory for average_mu_apply.1']
    %10 = vsyncpa [#allocation4], 0
    %11 = vsyncpa [#allocation6], 0
    // Predicated region
    $region2: #{average_mu_apply.1} parent=1 // pred_check
      _
    $region3: #{average_mu_apply.1} parent=1 // pred_check_branch
      %13 = sbr.rel (0) target = $region5
    $region4: #{average_mu_apply.1} parent=1 // pred_region
      _
    $region5: #{average_mu_apply.1} parent=1 // pred_fallthru
      _
    // Predicated region
    $region6: #{average_mu_apply.1} parent=1 // pred_check
      _
    $region7: #{average_mu_apply.1} parent=1 // pred_check_branch
      %15 = sbr.rel (0) target = $region9
    $region8: #{average_mu_apply.1} parent=1 // pred_region
      %s17 = ssub.s32 640, 640
      %18 = vsyncadd [#allocation4], %s17
      %s19 = sshll.u32 [#allocation3], 4
      %s20 = int_to_ptr.vmem [resolvable:$true] %s19
      %25 = dma.hbm_to_vmem [thread:$0]  %s1, 640, %s20, [#allocation4], 64, 64, 4
    $region9: #{average_mu_apply.1} parent=1 // pred_fallthru
      _
    // Predicated region
    $region10: #{average_mu_apply.1} parent=1 // pred_check
      _
    $region11: #{average_mu_apply.1} parent=1 // pred_check_branch
      %27 = sbr.rel (0) target = $region13
    $region12: #{average_mu_apply.1} parent=1 // pred_region
      %s29 = ssub.s32 8960, 8960
      %30 = vsyncadd [#allocation6], %s29
      %s31 = sshll.u32 [#allocation5], 4
      %s32 = int_to_ptr.vmem [resolvable:$true] %s31
      %37 = dma.hbm_to_vmem [thread:$0]  %s2, 8960, %s32, [#allocation6], 128, 128, 8
    $region13: #{average_mu_apply.1} parent=1 // pred_fallthru
      _
    // Predicated region
    $region14: #{average_mu_apply.1} parent=1 // pred_check
      _
    $region15: #{average_mu_apply.1} parent=1 // pred_check_branch
      %39 = sbr.rel (0) target = $region17
    $region16: #{average_mu_apply.1} parent=1 // pred_region
      _
    $region17: #{average_mu_apply.1} parent=1 // pred_fallthru
      _
    // Predicated region
    $region18: #{average_mu_apply.1} parent=1 // pred_check
      _
    $region19: #{average_mu_apply.1} parent=1 // pred_check_branch
      %41 = sbr.rel (0) target = $region21
    $region20: #{average_mu_apply.1} parent=1 // pred_region
      %42 = dma.done [#allocation4], 640
    $region21: #{average_mu_apply.1} parent=1 // pred_fallthru
      _
    // Predicated region
    $region22: #{average_mu_apply.1} parent=1 // pred_check
      _
    $region23: #{average_mu_apply.1} parent=1 // pred_check_branch
      %44 = sbr.rel (0) target = $region25
    $region24: #{average_mu_apply.1} parent=1 // pred_region
      %45 = dma.done [#allocation6], 8960
    $region25: #{average_mu_apply.1} parent=1 // pred_fallthru
      _
    %v46 = vld [vmem:[%s0] sm:$0xff]
    %v47 = vld [vmem:[#allocation3] sm:$0x1]
    %v48 = vld [vmem:[#allocation3 + $0x1] sm:$0x1]
    %v49 = vld [vmem:[#allocation3 + $0x2] sm:$0x1]
    %v50 = vld [vmem:[#allocation3 + $0x3] sm:$0x1]
    %52 = vset.pattern.permute.xlu0 0
    %53 = vperm.xlu0 %52, %v46
    %v54 = vpop.permute.xlu0 %53
    %v56 = vlaneseq
    %v57 = vshrl.u32 %v56, 7
    %v58 = vsub.s32 0, %v57
    %v59 = vrot.slane %v47, %v58
    %v60 = vmul.f32 %v54, %v59
    %v61 = vlaneseq
    %v62 = vshrl.u32 %v61, 7
    %v63 = vsub.s32 0, %v62
    %v64 = vrot.slane %v48, %v63
    %v65 = vadd.f32 %v60, %v64
    %v66 = vmax.f32 %v65, 0.0
    %v67 = vld [vmem:[#allocation5] sm:$0xff]
    %v68 = vld [vmem:[#allocation5 + $0x8] sm:$0xff]
    %v69 = vld [vmem:[#allocation5 + $0x10] sm:$0xff]
    %v70 = vld [vmem:[#allocation5 + $0x18] sm:$0xff]
    %v71 = vld [vmem:[#allocation5 + $0x20] sm:$0xff]
    %v72 = vld [vmem:[#allocation5 + $0x28] sm:$0xff]
    %v73 = vld [vmem:[#allocation5 + $0x30] sm:$0x3]
    %v74 = vlaneseq
    %v75 = vshrl.u32 %v74, 7
    %v76 = vsub.s32 0, %v75
    %v77 = vrot.slane %v49, %v76
    %vm78 = vcmask 408576
    %v80 = vsel %vm78, %v66, 0
    %vm82 = vcmask 1041408
    %v84 = vsel %vm82, %v73, 0
    %86 = vmatprep.subr.mxu0 0.0
    %87 = vmatpush1.msra.mxu0 %v67
    %88 = vmatprep.subr.mxu0 0.0
    %89 = vmatpush1.msra.mxu0 %v68
    %90 = vmatprep.subr.mxu0 0.0
    %91 = vmatpush1.msra.mxu0 %v69
    %92 = vmatprep.subr.mxu0 0.0
    %93 = vmatpush1.msra.mxu0 %v70
    %94 = vmatprep.subr.mxu0 0.0
    %95 = vmatpush1.msra.mxu0 %v71
    %96 = vmatprep.subr.mxu0 0.0
    %97 = vmatpush1.msra.mxu0 %v72
    %98 = vmatprep.subr.mxu0 0.0
    %99 = vmatpush1.msra.mxu0 %v84
    %100 = vmatprep.subr.mxu0 0.0
    %101 = vmatpush1.msra.mxu0 0.0
    %102 = vmatprep.subr.mxu0 0.0
    %103 = vmatpush1.msra.mxu0 0.0
    %104 = vmatprep.subr.mxu0 0.0
    %105 = vmatpush1.msra.mxu0 0.0
    %106 = vmatprep.subr.mxu0 0.0
    %107 = vmatpush1.msra.mxu0 0.0
    %108 = vmatprep.subr.mxu0 0.0
    %109 = vmatpush1.msra.mxu0 0.0
    %110 = vmatprep.subr.mxu0 0.0
    %111 = vmatpush1.msra.mxu0 0.0
    %112 = vmatprep.subr.mxu0 0.0
    %113 = vmatpush1.msra.mxu0 0.0
    %114 = vmatprep.subr.mxu0 0.0
    %115 = vmatpush1.msra.mxu0 0.0
    %116 = vmatprep.subr.mxu0 0.0
    %117 = vmatpush1.msra.mxu0 0.0
    %118 = vmatprep.subr.mxu0 0.0
    %119 = vmatpush1.msra.mxu0 0.0
    %120 = vmatprep.subr.mxu0 0.0
    %121 = vmatpush1.msra.mxu0 0.0
    %122 = vmatprep.subr.mxu0 0.0
    %123 = vmatpush1.msra.mxu0 0.0
    %124 = vmatprep.subr.mxu0 0.0
    %125 = vmatpush1.msra.mxu0 0.0
    %126 = vmatprep.subr.mxu0 0.0
    %127 = vmatpush1.msra.mxu0 0.0
    %128 = vmatprep.subr.mxu0 0.0
    %129 = vmatpush1.msra.mxu0 0.0
    %130 = vmatprep.subr.mxu0 0.0
    %131 = vmatpush1.msra.mxu0 0.0
    %132 = vmatprep.subr.mxu0 0.0
    %133 = vmatpush1.msra.mxu0 0.0
    %134 = vmatprep.subr.mxu0 0.0
    %135 = vmatpush1.msra.mxu0 0.0
    %136 = vmatprep.subr.mxu0 0.0
    %137 = vmatpush1.msra.mxu0 0.0
    %138 = vmatprep.subr.mxu0 0.0
    %139 = vmatpush1.msra.mxu0 0.0
    %140 = vmatprep.subr.mxu0 0.0
    %141 = vmatpush1.msra.mxu0 0.0
    %142 = vmatprep.subr.mxu0 0.0
    %143 = vmatpush1.msra.mxu0 0.0
    %144 = vmatprep.subr.mxu0 0.0
    %145 = vmatpush1.msra.mxu0 0.0
    %146 = vmatprep.subr.mxu0 0.0
    %147 = vmatpush1.msra.mxu0 0.0
    %148 = vmatprep.subr.mxu0 0.0
    %149 = vmatpush1.msra.mxu0 0.0
    %150 = vmatprep.mubr.f32.mxu0 0.0
    %151 = vmatmul.mubr.f32.gmra.mrb[0].mxu0 %v80
    %v152 = vpop.f32.mrb[0].mxu0
    %v153 = vadd.f32 %v77, %v152
    %v154 = vpop.f32.mrb[0].mxu0
    %155 = vdwg.mxu0
    %v156 = vmax.f32 %v153, 0.0
    %v157 = vlaneseq
    %v158 = vshrl.u32 %v157, 7
    %v159 = vsub.s32 0, %v158
    %v160 = vrot.slane %v50, %v159
    %v161 = vmul.f32 %v156, %v160
    %v162 = vsel %vm78, %v161, 0.0
    %163 = vadd.xlane.f32.xlu0 %v162
    %v164 = vpop.xlane.xlu0 %163
    %v165 = vadd.f32 %v164, 0.0
    %s166 = scalar_lea.vmem [#allocation3], 4
    %v167 = vld [vmem:[%s166] sm:$0x1]
    %v168 = vld [vmem:[%s166 + $0x1] sm:$0x1]
    %v169 = vld [vmem:[%s166 + $0x2] sm:$0x1]
    %v170 = vld [vmem:[%s166 + $0x3] sm:$0x1]
    %v171 = vlaneseq
    %v172 = vshrl.u32 %v171, 7
    %v173 = vsub.s32 0, %v172
    %v174 = vrot.slane %v167, %v173
    %v175 = vmul.f32 %v54, %v174
    %v176 = vlaneseq
    %v177 = vshrl.u32 %v176, 7
    %v178 = vsub.s32 0, %v177
    %v179 = vrot.slane %v168, %v178
    %v180 = vadd.f32 %v175, %v179
    %v181 = vmax.f32 %v180, 0.0
    %s182 = scalar_lea.vmem [#allocation5], 56
    %v183 = vld [vmem:[%s182] sm:$0xff]
    %v184 = vld [vmem:[%s182 + $0x8] sm:$0xff]
    %v185 = vld [vmem:[%s182 + $0x10] sm:$0xff]
    %v186 = vld [vmem:[%s182 + $0x18] sm:$0xff]
    %v187 = vld [vmem:[%s182 + $0x20] sm:$0xff]
    %v188 = vld [vmem:[%s182 + $0x28] sm:$0xff]
    %v189 = vld [vmem:[%s182 + $0x30] sm:$0x3]
    %v190 = vlaneseq
    %v191 = vshrl.u32 %v190, 7
    %v192 = vsub.s32 0, %v191
    %v193 = vrot.slane %v169, %v192
    %v195 = vsel %vm78, %v181, 0
    %v198 = vsel %vm82, %v189, 0
    %200 = vmatprep.subr.mxu0 0.0
    %201 = vmatpush1.msra.mxu0 %v183
    %202 = vmatprep.subr.mxu0 0.0
    %203 = vmatpush1.msra.mxu0 %v184
    %204 = vmatprep.subr.mxu0 0.0
    %205 = vmatpush1.msra.mxu0 %v185
    %206 = vmatprep.subr.mxu0 0.0
    %207 = vmatpush1.msra.mxu0 %v186
    %208 = vmatprep.subr.mxu0 0.0
    %209 = vmatpush1.msra.mxu0 %v187
    %210 = vmatprep.subr.mxu0 0.0
    %211 = vmatpush1.msra.mxu0 %v188
    %212 = vmatprep.subr.mxu0 0.0
    %213 = vmatpush1.msra.mxu0 %v198
    %214 = vmatprep.subr.mxu0 0.0
    %215 = vmatpush1.msra.mxu0 0.0
    %216 = vmatprep.subr.mxu0 0.0
    %217 = vmatpush1.msra.mxu0 0.0
    %218 = vmatprep.subr.mxu0 0.0
    %219 = vmatpush1.msra.mxu0 0.0
    %220 = vmatprep.subr.mxu0 0.0
    %221 = vmatpush1.msra.mxu0 0.0
    %222 = vmatprep.subr.mxu0 0.0
    %223 = vmatpush1.msra.mxu0 0.0
    %224 = vmatprep.subr.mxu0 0.0
    %225 = vmatpush1.msra.mxu0 0.0
    %226 = vmatprep.subr.mxu0 0.0
    %227 = vmatpush1.msra.mxu0 0.0
    %228 = vmatprep.subr.mxu0 0.0
    %229 = vmatpush1.msra.mxu0 0.0
    %230 = vmatprep.subr.mxu0 0.0
    %231 = vmatpush1.msra.mxu0 0.0
    %232 = vmatprep.subr.mxu0 0.0
    %233 = vmatpush1.msra.mxu0 0.0
    %234 = vmatprep.subr.mxu0 0.0
    %235 = vmatpush1.msra.mxu0 0.0
    %236 = vmatprep.subr.mxu0 0.0
    %237 = vmatpush1.msra.mxu0 0.0
    %238 = vmatprep.subr.mxu0 0.0
    %239 = vmatpush1.msra.mxu0 0.0
    %240 = vmatprep.subr.mxu0 0.0
    %241 = vmatpush1.msra.mxu0 0.0
    %242 = vmatprep.subr.mxu0 0.0
    %243 = vmatpush1.msra.mxu0 0.0
    %244 = vmatprep.subr.mxu0 0.0
    %245 = vmatpush1.msra.mxu0 0.0
    %246 = vmatprep.subr.mxu0 0.0
    %247 = vmatpush1.msra.mxu0 0.0
    %248 = vmatprep.subr.mxu0 0.0
    %249 = vmatpush1.msra.mxu0 0.0
    %250 = vmatprep.subr.mxu0 0.0
    %251 = vmatpush1.msra.mxu0 0.0
    %252 = vmatprep.subr.mxu0 0.0
    %253 = vmatpush1.msra.mxu0 0.0
    %254 = vmatprep.subr.mxu0 0.0
    %255 = vmatpush1.msra.mxu0 0.0
    %256 = vmatprep.subr.mxu0 0.0
    %257 = vmatpush1.msra.mxu0 0.0
    %258 = vmatprep.subr.mxu0 0.0
    %259 = vmatpush1.msra.mxu0 0.0
    %260 = vmatprep.subr.mxu0 0.0
    %261 = vmatpush1.msra.mxu0 0.0
    %262 = vmatprep.subr.mxu0 0.0
    %263 = vmatpush1.msra.mxu0 0.0
    %264 = vmatprep.mubr.f32.mxu0 0.0
    %265 = vmatmul.mubr.f32.gmra.mrb[0].mxu0 %v195
    %v266 = vpop.f32.mrb[0].mxu0
    %v267 = vadd.f32 %v193, %v266
    %v268 = vpop.f32.mrb[0].mxu0
    %269 = vdwg.mxu0
    %v270 = vmax.f32 %v267, 0.0
    %v271 = vlaneseq
    %v272 = vshrl.u32 %v271, 7
    %v273 = vsub.s32 0, %v272
    %v274 = vrot.slane %v170, %v273
    %v275 = vmul.f32 %v270, %v274
    %v276 = vsel %vm78, %v275, 0.0
    %277 = vadd.xlane.f32.xlu0 %v276
    %v278 = vpop.xlane.xlu0 %277
    %v279 = vadd.f32 %v165, %v278
    %s280 = scalar_lea.vmem [#allocation3], 8
    %v281 = vld [vmem:[%s280] sm:$0x1]
    %v282 = vld [vmem:[%s280 + $0x1] sm:$0x1]
    %v283 = vld [vmem:[%s280 + $0x2] sm:$0x1]
    %v284 = vld [vmem:[%s280 + $0x3] sm:$0x1]
    %v285 = vlaneseq
    %v286 = vshrl.u32 %v285, 7
    %v287 = vsub.s32 0, %v286
    %v288 = vrot.slane %v281, %v287
    %v289 = vmul.f32 %v54, %v288
    %v290 = vlaneseq
    %v291 = vshrl.u32 %v290, 7
    %v292 = vsub.s32 0, %v291
    %v293 = vrot.slane %v282, %v292
    %v294 = vadd.f32 %v289, %v293
    %v295 = vmax.f32 %v294, 0.0
    %s296 = scalar_lea.vmem [#allocation5], 112
    %v297 = vld [vmem:[%s296] sm:$0xff]
    %v298 = vld [vmem:[%s296 + $0x8] sm:$0xff]
    %v299 = vld [vmem:[%s296 + $0x10] sm:$0xff]
    %v300 = vld [vmem:[%s296 + $0x18] sm:$0xff]
    %v301 = vld [vmem:[%s296 + $0x20] sm:$0xff]
    %v302 = vld [vmem:[%s296 + $0x28] sm:$0xff]
    %v303 = vld [vmem:[%s296 + $0x30] sm:$0x3]
    %v304 = vlaneseq
    %v305 = vshrl.u32 %v304, 7
    %v306 = vsub.s32 0, %v305
    %v307 = vrot.slane %v283, %v306
    %v309 = vsel %vm78, %v295, 0
    %v312 = vsel %vm82, %v303, 0
    %314 = vmatprep.subr.mxu0 0.0
    %315 = vmatpush1.msra.mxu0 %v297
    %316 = vmatprep.subr.mxu0 0.0
    %317 = vmatpush1.msra.mxu0 %v298
    %318 = vmatprep.subr.mxu0 0.0
    %319 = vmatpush1.msra.mxu0 %v299
    %320 = vmatprep.subr.mxu0 0.0
    %321 = vmatpush1.msra.mxu0 %v300
    %322 = vmatprep.subr.mxu0 0.0
    %323 = vmatpush1.msra.mxu0 %v301
    %324 = vmatprep.subr.mxu0 0.0
    %325 = vmatpush1.msra.mxu0 %v302
    %326 = vmatprep.subr.mxu0 0.0
    %327 = vmatpush1.msra.mxu0 %v312
    %328 = vmatprep.subr.mxu0 0.0
    %329 = vmatpush1.msra.mxu0 0.0
    %330 = vmatprep.subr.mxu0 0.0
    %331 = vmatpush1.msra.mxu0 0.0
    %332 = vmatprep.subr.mxu0 0.0
    %333 = vmatpush1.msra.mxu0 0.0
    %334 = vmatprep.subr.mxu0 0.0
    %335 = vmatpush1.msra.mxu0 0.0
    %336 = vmatprep.subr.mxu0 0.0
    %337 = vmatpush1.msra.mxu0 0.0
    %338 = vmatprep.subr.mxu0 0.0
    %339 = vmatpush1.msra.mxu0 0.0
    %340 = vmatprep.subr.mxu0 0.0
    %341 = vmatpush1.msra.mxu0 0.0
    %342 = vmatprep.subr.mxu0 0.0
    %343 = vmatpush1.msra.mxu0 0.0
    %344 = vmatprep.subr.mxu0 0.0
    %345 = vmatpush1.msra.mxu0 0.0
    %346 = vmatprep.subr.mxu0 0.0
    %347 = vmatpush1.msra.mxu0 0.0
    %348 = vmatprep.subr.mxu0 0.0
    %349 = vmatpush1.msra.mxu0 0.0
    %350 = vmatprep.subr.mxu0 0.0
    %351 = vmatpush1.msra.mxu0 0.0
    %352 = vmatprep.subr.mxu0 0.0
    %353 = vmatpush1.msra.mxu0 0.0
    %354 = vmatprep.subr.mxu0 0.0
    %355 = vmatpush1.msra.mxu0 0.0
    %356 = vmatprep.subr.mxu0 0.0
    %357 = vmatpush1.msra.mxu0 0.0
    %358 = vmatprep.subr.mxu0 0.0
    %359 = vmatpush1.msra.mxu0 0.0
    %360 = vmatprep.subr.mxu0 0.0
    %361 = vmatpush1.msra.mxu0 0.0
    %362 = vmatprep.subr.mxu0 0.0
    %363 = vmatpush1.msra.mxu0 0.0
    %364 = vmatprep.subr.mxu0 0.0
    %365 = vmatpush1.msra.mxu0 0.0
    %366 = vmatprep.subr.mxu0 0.0
    %367 = vmatpush1.msra.mxu0 0.0
    %368 = vmatprep.subr.mxu0 0.0
    %369 = vmatpush1.msra.mxu0 0.0
    %370 = vmatprep.subr.mxu0 0.0
    %371 = vmatpush1.msra.mxu0 0.0
    %372 = vmatprep.subr.mxu0 0.0
    %373 = vmatpush1.msra.mxu0 0.0
    %374 = vmatprep.subr.mxu0 0.0
    %375 = vmatpush1.msra.mxu0 0.0
    %376 = vmatprep.subr.mxu0 0.0
    %377 = vmatpush1.msra.mxu0 0.0
    %378 = vmatprep.mubr.f32.mxu0 0.0
    %379 = vmatmul.mubr.f32.gmra.mrb[0].mxu0 %v309
    %v380 = vpop.f32.mrb[0].mxu0
    %v381 = vadd.f32 %v307, %v380
    %v382 = vpop.f32.mrb[0].mxu0
    %383 = vdwg.mxu0
    %v384 = vmax.f32 %v381, 0.0
    %v385 = vlaneseq
    %v386 = vshrl.u32 %v385, 7
    %v387 = vsub.s32 0, %v386
    %v388 = vrot.slane %v284, %v387
    %v389 = vmul.f32 %v384, %v388
    %v390 = vsel %vm78, %v389, 0.0
    %391 = vadd.xlane.f32.xlu0 %v390
    %v392 = vpop.xlane.xlu0 %391
    %v393 = vadd.f32 %v279, %v392
    %s394 = scalar_lea.vmem [#allocation3], 12
    %v395 = vld [vmem:[%s394] sm:$0x1]
    %v396 = vld [vmem:[%s394 + $0x1] sm:$0x1]
    %v397 = vld [vmem:[%s394 + $0x2] sm:$0x1]
    %v398 = vld [vmem:[%s394 + $0x3] sm:$0x1]
    %v399 = vlaneseq
    %v400 = vshrl.u32 %v399, 7
    %v401 = vsub.s32 0, %v400
    %v402 = vrot.slane %v395, %v401
    %v403 = vmul.f32 %v54, %v402
    %v404 = vlaneseq
    %v405 = vshrl.u32 %v404, 7
    %v406 = vsub.s32 0, %v405
    %v407 = vrot.slane %v396, %v406
    %v408 = vadd.f32 %v403, %v407
    %v409 = vmax.f32 %v408, 0.0
    %s410 = scalar_lea.vmem [#allocation5], 168
    %v411 = vld [vmem:[%s410] sm:$0xff]
    %v412 = vld [vmem:[%s410 + $0x8] sm:$0xff]
    %v413 = vld [vmem:[%s410 + $0x10] sm:$0xff]
    %v414 = vld [vmem:[%s410 + $0x18] sm:$0xff]
    %v415 = vld [vmem:[%s410 + $0x20] sm:$0xff]
    %v416 = vld [vmem:[%s410 + $0x28] sm:$0xff]
    %v417 = vld [vmem:[%s410 + $0x30] sm:$0x3]
    %v418 = vlaneseq
    %v419 = vshrl.u32 %v418, 7
    %v420 = vsub.s32 0, %v419
    %v421 = vrot.slane %v397, %v420
    %v423 = vsel %vm78, %v409, 0
    %v426 = vsel %vm82, %v417, 0
    %428 = vmatprep.subr.mxu0 0.0
    %429 = vmatpush1.msra.mxu0 %v411
    %430 = vmatprep.subr.mxu0 0.0
    %431 = vmatpush1.msra.mxu0 %v412
    %432 = vmatprep.subr.mxu0 0.0
    %433 = vmatpush1.msra.mxu0 %v413
    %434 = vmatprep.subr.mxu0 0.0
    %435 = vmatpush1.msra.mxu0 %v414
    %436 = vmatprep.subr.mxu0 0.0
    %437 = vmatpush1.msra.mxu0 %v415
    %438 = vmatprep.subr.mxu0 0.0
    %439 = vmatpush1.msra.mxu0 %v416
    %440 = vmatprep.subr.mxu0 0.0
    %441 = vmatpush1.msra.mxu0 %v426
    %442 = vmatprep.subr.mxu0 0.0
    %443 = vmatpush1.msra.mxu0 0.0
    %444 = vmatprep.subr.mxu0 0.0
    %445 = vmatpush1.msra.mxu0 0.0
    %446 = vmatprep.subr.mxu0 0.0
    %447 = vmatpush1.msra.mxu0 0.0
    %448 = vmatprep.subr.mxu0 0.0
    %449 = vmatpush1.msra.mxu0 0.0
    %450 = vmatprep.subr.mxu0 0.0
    %451 = vmatpush1.msra.mxu0 0.0
    %452 = vmatprep.subr.mxu0 0.0
    %453 = vmatpush1.msra.mxu0 0.0
    %454 = vmatprep.subr.mxu0 0.0
    %455 = vmatpush1.msra.mxu0 0.0
    %456 = vmatprep.subr.mxu0 0.0
    %457 = vmatpush1.msra.mxu0 0.0
    %458 = vmatprep.subr.mxu0 0.0
    %459 = vmatpush1.msra.mxu0 0.0
    %460 = vmatprep.subr.mxu0 0.0
    %461 = vmatpush1.msra.mxu0 0.0
    %462 = vmatprep.subr.mxu0 0.0
    %463 = vmatpush1.msra.mxu0 0.0
    %464 = vmatprep.subr.mxu0 0.0
    %465 = vmatpush1.msra.mxu0 0.0
    %466 = vmatprep.subr.mxu0 0.0
    %467 = vmatpush1.msra.mxu0 0.0
    %468 = vmatprep.subr.mxu0 0.0
    %469 = vmatpush1.msra.mxu0 0.0
    %470 = vmatprep.subr.mxu0 0.0
    %471 = vmatpush1.msra.mxu0 0.0
    %472 = vmatprep.subr.mxu0 0.0
    %473 = vmatpush1.msra.mxu0 0.0
    %474 = vmatprep.subr.mxu0 0.0
    %475 = vmatpush1.msra.mxu0 0.0
    %476 = vmatprep.subr.mxu0 0.0
    %477 = vmatpush1.msra.mxu0 0.0
    %478 = vmatprep.subr.mxu0 0.0
    %479 = vmatpush1.msra.mxu0 0.0
    %480 = vmatprep.subr.mxu0 0.0
    %481 = vmatpush1.msra.mxu0 0.0
    %482 = vmatprep.subr.mxu0 0.0
    %483 = vmatpush1.msra.mxu0 0.0
    %484 = vmatprep.subr.mxu0 0.0
    %485 = vmatpush1.msra.mxu0 0.0
    %486 = vmatprep.subr.mxu0 0.0
    %487 = vmatpush1.msra.mxu0 0.0
    %488 = vmatprep.subr.mxu0 0.0
    %489 = vmatpush1.msra.mxu0 0.0
    %490 = vmatprep.subr.mxu0 0.0
    %491 = vmatpush1.msra.mxu0 0.0
    %492 = vmatprep.mubr.f32.mxu0 0.0
    %493 = vmatmul.mubr.f32.gmra.mrb[0].mxu0 %v423
    %v494 = vpop.f32.mrb[0].mxu0
    %v495 = vadd.f32 %v421, %v494
    %v496 = vpop.f32.mrb[0].mxu0
    %497 = vdwg.mxu0
    %v498 = vmax.f32 %v495, 0.0
    %v499 = vlaneseq
    %v500 = vshrl.u32 %v499, 7
    %v501 = vsub.s32 0, %v500
    %v502 = vrot.slane %v398, %v501
    %v503 = vmul.f32 %v498, %v502
    %v504 = vsel %vm78, %v503, 0.0
    %505 = vadd.xlane.f32.xlu0 %v504
    %v506 = vpop.xlane.xlu0 %505
    %v507 = vadd.f32 %v393, %v506
    %s508 = scalar_lea.vmem [#allocation3], 16
    %v509 = vld [vmem:[%s508] sm:$0x1]
    %v510 = vld [vmem:[%s508 + $0x1] sm:$0x1]
    %v511 = vld [vmem:[%s508 + $0x2] sm:$0x1]
    %v512 = vld [vmem:[%s508 + $0x3] sm:$0x1]
    %v513 = vlaneseq
    %v514 = vshrl.u32 %v513, 7
    %v515 = vsub.s32 0, %v514
    %v516 = vrot.slane %v509, %v515
    %v517 = vmul.f32 %v54, %v516
    %v518 = vlaneseq
    %v519 = vshrl.u32 %v518, 7
    %v520 = vsub.s32 0, %v519
    %v521 = vrot.slane %v510, %v520
    %v522 = vadd.f32 %v517, %v521
    %v523 = vmax.f32 %v522, 0.0
    %s524 = scalar_lea.vmem [#allocation5], 224
    %v525 = vld [vmem:[%s524] sm:$0xff]
    %v526 = vld [vmem:[%s524 + $0x8] sm:$0xff]
    %v527 = vld [vmem:[%s524 + $0x10] sm:$0xff]
    %v528 = vld [vmem:[%s524 + $0x18] sm:$0xff]
    %v529 = vld [vmem:[%s524 + $0x20] sm:$0xff]
    %v530 = vld [vmem:[%s524 + $0x28] sm:$0xff]
    %v531 = vld [vmem:[%s524 + $0x30] sm:$0x3]
    %v532 = vlaneseq
    %v533 = vshrl.u32 %v532, 7
    %v534 = vsub.s32 0, %v533
    %v535 = vrot.slane %v511, %v534
    %v537 = vsel %vm78, %v523, 0
    %v540 = vsel %vm82, %v531, 0
    %542 = vmatprep.subr.mxu0 0.0
    %543 = vmatpush1.msra.mxu0 %v525
    %544 = vmatprep.subr.mxu0 0.0
    %545 = vmatpush1.msra.mxu0 %v526
    %546 = vmatprep.subr.mxu0 0.0
    %547 = vmatpush1.msra.mxu0 %v527
    %548 = vmatprep.subr.mxu0 0.0
    %549 = vmatpush1.msra.mxu0 %v528
    %550 = vmatprep.subr.mxu0 0.0
    %551 = vmatpush1.msra.mxu0 %v529
    %552 = vmatprep.subr.mxu0 0.0
    %553 = vmatpush1.msra.mxu0 %v530
    %554 = vmatprep.subr.mxu0 0.0
    %555 = vmatpush1.msra.mxu0 %v540
    %556 = vmatprep.subr.mxu0 0.0
    %557 = vmatpush1.msra.mxu0 0.0
    %558 = vmatprep.subr.mxu0 0.0
    %559 = vmatpush1.msra.mxu0 0.0
    %560 = vmatprep.subr.mxu0 0.0
    %561 = vmatpush1.msra.mxu0 0.0
    %562 = vmatprep.subr.mxu0 0.0
    %563 = vmatpush1.msra.mxu0 0.0
    %564 = vmatprep.subr.mxu0 0.0
    %565 = vmatpush1.msra.mxu0 0.0
    %566 = vmatprep.subr.mxu0 0.0
    %567 = vmatpush1.msra.mxu0 0.0
    %568 = vmatprep.subr.mxu0 0.0
    %569 = vmatpush1.msra.mxu0 0.0
    %570 = vmatprep.subr.mxu0 0.0
    %571 = vmatpush1.msra.mxu0 0.0
    %572 = vmatprep.subr.mxu0 0.0
    %573 = vmatpush1.msra.mxu0 0.0
    %574 = vmatprep.subr.mxu0 0.0
    %575 = vmatpush1.msra.mxu0 0.0
    %576 = vmatprep.subr.mxu0 0.0
    %577 = vmatpush1.msra.mxu0 0.0
    %578 = vmatprep.subr.mxu0 0.0
    %579 = vmatpush1.msra.mxu0 0.0
    %580 = vmatprep.subr.mxu0 0.0
    %581 = vmatpush1.msra.mxu0 0.0
    %582 = vmatprep.subr.mxu0 0.0
    %583 = vmatpush1.msra.mxu0 0.0
    %584 = vmatprep.subr.mxu0 0.0
    %585 = vmatpush1.msra.mxu0 0.0
    %586 = vmatprep.subr.mxu0 0.0
    %587 = vmatpush1.msra.mxu0 0.0
    %588 = vmatprep.subr.mxu0 0.0
    %589 = vmatpush1.msra.mxu0 0.0
    %590 = vmatprep.subr.mxu0 0.0
    %591 = vmatpush1.msra.mxu0 0.0
    %592 = vmatprep.subr.mxu0 0.0
    %593 = vmatpush1.msra.mxu0 0.0
    %594 = vmatprep.subr.mxu0 0.0
    %595 = vmatpush1.msra.mxu0 0.0
    %596 = vmatprep.subr.mxu0 0.0
    %597 = vmatpush1.msra.mxu0 0.0
    %598 = vmatprep.subr.mxu0 0.0
    %599 = vmatpush1.msra.mxu0 0.0
    %600 = vmatprep.subr.mxu0 0.0
    %601 = vmatpush1.msra.mxu0 0.0
    %602 = vmatprep.subr.mxu0 0.0
    %603 = vmatpush1.msra.mxu0 0.0
    %604 = vmatprep.subr.mxu0 0.0
    %605 = vmatpush1.msra.mxu0 0.0
    %606 = vmatprep.mubr.f32.mxu0 0.0
    %607 = vmatmul.mubr.f32.gmra.mrb[0].mxu0 %v537
    %v608 = vpop.f32.mrb[0].mxu0
    %v609 = vadd.f32 %v535, %v608
    %v610 = vpop.f32.mrb[0].mxu0
    %611 = vdwg.mxu0
    %v612 = vmax.f32 %v609, 0.0
    %v613 = vlaneseq
    %v614 = vshrl.u32 %v613, 7
    %v615 = vsub.s32 0, %v614
    %v616 = vrot.slane %v512, %v615
    %v617 = vmul.f32 %v612, %v616
    %v618 = vsel %vm78, %v617, 0.0
    %619 = vadd.xlane.f32.xlu0 %v618
    %v620 = vpop.xlane.xlu0 %619
    %v621 = vadd.f32 %v507, %v620
    %s622 = scalar_lea.vmem [#allocation3], 20
    %v623 = vld [vmem:[%s622] sm:$0x1]
    %v624 = vld [vmem:[%s622 + $0x1] sm:$0x1]
    %v625 = vld [vmem:[%s622 + $0x2] sm:$0x1]
    %v626 = vld [vmem:[%s622 + $0x3] sm:$0x1]
    %v627 = vlaneseq
    %v628 = vshrl.u32 %v627, 7
    %v629 = vsub.s32 0, %v628
    %v630 = vrot.slane %v623, %v629
    %v631 = vmul.f32 %v54, %v630
    %v632 = vlaneseq
    %v633 = vshrl.u32 %v632, 7
    %v634 = vsub.s32 0, %v633
    %v635 = vrot.slane %v624, %v634
    %v636 = vadd.f32 %v631, %v635
    %v637 = vmax.f32 %v636, 0.0
    %s638 = scalar_lea.vmem [#allocation5], 280
    %v639 = vld [vmem:[%s638] sm:$0xff]
    %v640 = vld [vmem:[%s638 + $0x8] sm:$0xff]
    %v641 = vld [vmem:[%s638 + $0x10] sm:$0xff]
    %v642 = vld [vmem:[%s638 + $0x18] sm:$0xff]
    %v643 = vld [vmem:[%s638 + $0x20] sm:$0xff]
    %v644 = vld [vmem:[%s638 + $0x28] sm:$0xff]
    %v645 = vld [vmem:[%s638 + $0x30] sm:$0x3]
    %v646 = vlaneseq
    %v647 = vshrl.u32 %v646, 7
    %v648 = vsub.s32 0, %v647
    %v649 = vrot.slane %v625, %v648
    %v651 = vsel %vm78, %v637, 0
    %v654 = vsel %vm82, %v645, 0
    %656 = vmatprep.subr.mxu0 0.0
    %657 = vmatpush1.msra.mxu0 %v639
    %658 = vmatprep.subr.mxu0 0.0
    %659 = vmatpush1.msra.mxu0 %v640
    %660 = vmatprep.subr.mxu0 0.0
    %661 = vmatpush1.msra.mxu0 %v641
    %662 = vmatprep.subr.mxu0 0.0
    %663 = vmatpush1.msra.mxu0 %v642
    %664 = vmatprep.subr.mxu0 0.0
    %665 = vmatpush1.msra.mxu0 %v643
    %666 = vmatprep.subr.mxu0 0.0
    %667 = vmatpush1.msra.mxu0 %v644
    %668 = vmatprep.subr.mxu0 0.0
    %669 = vmatpush1.msra.mxu0 %v654
    %670 = vmatprep.subr.mxu0 0.0
    %671 = vmatpush1.msra.mxu0 0.0
    %672 = vmatprep.subr.mxu0 0.0
    %673 = vmatpush1.msra.mxu0 0.0
    %674 = vmatprep.subr.mxu0 0.0
    %675 = vmatpush1.msra.mxu0 0.0
    %676 = vmatprep.subr.mxu0 0.0
    %677 = vmatpush1.msra.mxu0 0.0
    %678 = vmatprep.subr.mxu0 0.0
    %679 = vmatpush1.msra.mxu0 0.0
    %680 = vmatprep.subr.mxu0 0.0
    %681 = vmatpush1.msra.mxu0 0.0
    %682 = vmatprep.subr.mxu0 0.0
    %683 = vmatpush1.msra.mxu0 0.0
    %684 = vmatprep.subr.mxu0 0.0
    %685 = vmatpush1.msra.mxu0 0.0
    %686 = vmatprep.subr.mxu0 0.0
    %687 = vmatpush1.msra.mxu0 0.0
    %688 = vmatprep.subr.mxu0 0.0
    %689 = vmatpush1.msra.mxu0 0.0
    %690 = vmatprep.subr.mxu0 0.0
    %691 = vmatpush1.msra.mxu0 0.0
    %692 = vmatprep.subr.mxu0 0.0
    %693 = vmatpush1.msra.mxu0 0.0
    %694 = vmatprep.subr.mxu0 0.0
    %695 = vmatpush1.msra.mxu0 0.0
    %696 = vmatprep.subr.mxu0 0.0
    %697 = vmatpush1.msra.mxu0 0.0
    %698 = vmatprep.subr.mxu0 0.0
    %699 = vmatpush1.msra.mxu0 0.0
    %700 = vmatprep.subr.mxu0 0.0
    %701 = vmatpush1.msra.mxu0 0.0
    %702 = vmatprep.subr.mxu0 0.0
    %703 = vmatpush1.msra.mxu0 0.0
    %704 = vmatprep.subr.mxu0 0.0
    %705 = vmatpush1.msra.mxu0 0.0
    %706 = vmatprep.subr.mxu0 0.0
    %707 = vmatpush1.msra.mxu0 0.0
    %708 = vmatprep.subr.mxu0 0.0
    %709 = vmatpush1.msra.mxu0 0.0
    %710 = vmatprep.subr.mxu0 0.0
    %711 = vmatpush1.msra.mxu0 0.0
    %712 = vmatprep.subr.mxu0 0.0
    %713 = vmatpush1.msra.mxu0 0.0
    %714 = vmatprep.subr.mxu0 0.0
    %715 = vmatpush1.msra.mxu0 0.0
    %716 = vmatprep.subr.mxu0 0.0
    %717 = vmatpush1.msra.mxu0 0.0
    %718 = vmatprep.subr.mxu0 0.0
    %719 = vmatpush1.msra.mxu0 0.0
    %720 = vmatprep.mubr.f32.mxu0 0.0
    %721 = vmatmul.mubr.f32.gmra.mrb[0].mxu0 %v651
    %v722 = vpop.f32.mrb[0].mxu0
    %v723 = vadd.f32 %v649, %v722
    %v724 = vpop.f32.mrb[0].mxu0
    %725 = vdwg.mxu0
    %v726 = vmax.f32 %v723, 0.0
    %v727 = vlaneseq
    %v728 = vshrl.u32 %v727, 7
    %v729 = vsub.s32 0, %v728
    %v730 = vrot.slane %v626, %v729
    %v731 = vmul.f32 %v726, %v730
    %v732 = vsel %vm78, %v731, 0.0
    %733 = vadd.xlane.f32.xlu0 %v732
    %v734 = vpop.xlane.xlu0 %733
    %v735 = vadd.f32 %v621, %v734
    %s736 = scalar_lea.vmem [#allocation3], 24
    %v737 = vld [vmem:[%s736] sm:$0x1]
    %v738 = vld [vmem:[%s736 + $0x1] sm:$0x1]
    %v739 = vld [vmem:[%s736 + $0x2] sm:$0x1]
    %v740 = vld [vmem:[%s736 + $0x3] sm:$0x1]
    %v741 = vlaneseq
    %v742 = vshrl.u32 %v741, 7
    %v743 = vsub.s32 0, %v742
    %v744 = vrot.slane %v737, %v743
    %v745 = vmul.f32 %v54, %v744
    %v746 = vlaneseq
    %v747 = vshrl.u32 %v746, 7
    %v748 = vsub.s32 0, %v747
    %v749 = vrot.slane %v738, %v748
    %v750 = vadd.f32 %v745, %v749
    %v751 = vmax.f32 %v750, 0.0
    %s752 = scalar_lea.vmem [#allocation5], 336
    %v753 = vld [vmem:[%s752] sm:$0xff]
    %v754 = vld [vmem:[%s752 + $0x8] sm:$0xff]
    %v755 = vld [vmem:[%s752 + $0x10] sm:$0xff]
    %v756 = vld [vmem:[%s752 + $0x18] sm:$0xff]
    %v757 = vld [vmem:[%s752 + $0x20] sm:$0xff]
    %v758 = vld [vmem:[%s752 + $0x28] sm:$0xff]
    %v759 = vld [vmem:[%s752 + $0x30] sm:$0x3]
    %v760 = vlaneseq
    %v761 = vshrl.u32 %v760, 7
    %v762 = vsub.s32 0, %v761
    %v763 = vrot.slane %v739, %v762
    %v765 = vsel %vm78, %v751, 0
    %v768 = vsel %vm82, %v759, 0
    %770 = vmatprep.subr.mxu0 0.0
    %771 = vmatpush1.msra.mxu0 %v753
    %772 = vmatprep.subr.mxu0 0.0
    %773 = vmatpush1.msra.mxu0 %v754
    %774 = vmatprep.subr.mxu0 0.0
    %775 = vmatpush1.msra.mxu0 %v755
    %776 = vmatprep.subr.mxu0 0.0
    %777 = vmatpush1.msra.mxu0 %v756
    %778 = vmatprep.subr.mxu0 0.0
    %779 = vmatpush1.msra.mxu0 %v757
    %780 = vmatprep.subr.mxu0 0.0
    %781 = vmatpush1.msra.mxu0 %v758
    %782 = vmatprep.subr.mxu0 0.0
    %783 = vmatpush1.msra.mxu0 %v768
    %784 = vmatprep.subr.mxu0 0.0
    %785 = vmatpush1.msra.mxu0 0.0
    %786 = vmatprep.subr.mxu0 0.0
    %787 = vmatpush1.msra.mxu0 0.0
    %788 = vmatprep.subr.mxu0 0.0
    %789 = vmatpush1.msra.mxu0 0.0
    %790 = vmatprep.subr.mxu0 0.0
    %791 = vmatpush1.msra.mxu0 0.0
    %792 = vmatprep.subr.mxu0 0.0
    %793 = vmatpush1.msra.mxu0 0.0
    %794 = vmatprep.subr.mxu0 0.0
    %795 = vmatpush1.msra.mxu0 0.0
    %796 = vmatprep.subr.mxu0 0.0
    %797 = vmatpush1.msra.mxu0 0.0
    %798 = vmatprep.subr.mxu0 0.0
    %799 = vmatpush1.msra.mxu0 0.0
    %800 = vmatprep.subr.mxu0 0.0
    %801 = vmatpush1.msra.mxu0 0.0
    %802 = vmatprep.subr.mxu0 0.0
    %803 = vmatpush1.msra.mxu0 0.0
    %804 = vmatprep.subr.mxu0 0.0
    %805 = vmatpush1.msra.mxu0 0.0
    %806 = vmatprep.subr.mxu0 0.0
    %807 = vmatpush1.msra.mxu0 0.0
    %808 = vmatprep.subr.mxu0 0.0
    %809 = vmatpush1.msra.mxu0 0.0
    %810 = vmatprep.subr.mxu0 0.0
    %811 = vmatpush1.msra.mxu0 0.0
    %812 = vmatprep.subr.mxu0 0.0
    %813 = vmatpush1.msra.mxu0 0.0
    %814 = vmatprep.subr.mxu0 0.0
    %815 = vmatpush1.msra.mxu0 0.0
    %816 = vmatprep.subr.mxu0 0.0
    %817 = vmatpush1.msra.mxu0 0.0
    %818 = vmatprep.subr.mxu0 0.0
    %819 = vmatpush1.msra.mxu0 0.0
    %820 = vmatprep.subr.mxu0 0.0
    %821 = vmatpush1.msra.mxu0 0.0
    %822 = vmatprep.subr.mxu0 0.0
    %823 = vmatpush1.msra.mxu0 0.0
    %824 = vmatprep.subr.mxu0 0.0
    %825 = vmatpush1.msra.mxu0 0.0
    %826 = vmatprep.subr.mxu0 0.0
    %827 = vmatpush1.msra.mxu0 0.0
    %828 = vmatprep.subr.mxu0 0.0
    %829 = vmatpush1.msra.mxu0 0.0
    %830 = vmatprep.subr.mxu0 0.0
    %831 = vmatpush1.msra.mxu0 0.0
    %832 = vmatprep.subr.mxu0 0.0
    %833 = vmatpush1.msra.mxu0 0.0
    %834 = vmatprep.mubr.f32.mxu0 0.0
    %835 = vmatmul.mubr.f32.gmra.mrb[0].mxu0 %v765
    %v836 = vpop.f32.mrb[0].mxu0
    %v837 = vadd.f32 %v763, %v836
    %v838 = vpop.f32.mrb[0].mxu0
    %839 = vdwg.mxu0
    %v840 = vmax.f32 %v837, 0.0
    %v841 = vlaneseq
    %v842 = vshrl.u32 %v841, 7
    %v843 = vsub.s32 0, %v842
    %v844 = vrot.slane %v740, %v843
    %v845 = vmul.f32 %v840, %v844
    %v846 = vsel %vm78, %v845, 0.0
    %847 = vadd.xlane.f32.xlu0 %v846
    %v848 = vpop.xlane.xlu0 %847
    %v849 = vadd.f32 %v735, %v848
    %s850 = scalar_lea.vmem [#allocation3], 28
    %v851 = vld [vmem:[%s850] sm:$0x1]
    %v852 = vld [vmem:[%s850 + $0x1] sm:$0x1]
    %v853 = vld [vmem:[%s850 + $0x2] sm:$0x1]
    %v854 = vld [vmem:[%s850 + $0x3] sm:$0x1]
    %v855 = vlaneseq
    %v856 = vshrl.u32 %v855, 7
    %v857 = vsub.s32 0, %v856
    %v858 = vrot.slane %v851, %v857
    %v859 = vmul.f32 %v54, %v858
    %v860 = vlaneseq
    %v861 = vshrl.u32 %v860, 7
    %v862 = vsub.s32 0, %v861
    %v863 = vrot.slane %v852, %v862
    %v864 = vadd.f32 %v859, %v863
    %v865 = vmax.f32 %v864, 0.0
    %s866 = scalar_lea.vmem [#allocation5], 392
    %v867 = vld [vmem:[%s866] sm:$0xff]
    %v868 = vld [vmem:[%s866 + $0x8] sm:$0xff]
    %v869 = vld [vmem:[%s866 + $0x10] sm:$0xff]
    %v870 = vld [vmem:[%s866 + $0x18] sm:$0xff]
    %v871 = vld [vmem:[%s866 + $0x20] sm:$0xff]
    %v872 = vld [vmem:[%s866 + $0x28] sm:$0xff]
    %v873 = vld [vmem:[%s866 + $0x30] sm:$0x3]
    %v874 = vlaneseq
    %v875 = vshrl.u32 %v874, 7
    %v876 = vsub.s32 0, %v875
    %v877 = vrot.slane %v853, %v876
    %v879 = vsel %vm78, %v865, 0
    %v882 = vsel %vm82, %v873, 0
    %884 = vmatprep.subr.mxu0 0.0
    %885 = vmatpush1.msra.mxu0 %v867
    %886 = vmatprep.subr.mxu0 0.0
    %887 = vmatpush1.msra.mxu0 %v868
    %888 = vmatprep.subr.mxu0 0.0
    %889 = vmatpush1.msra.mxu0 %v869
    %890 = vmatprep.subr.mxu0 0.0
    %891 = vmatpush1.msra.mxu0 %v870
    %892 = vmatprep.subr.mxu0 0.0
    %893 = vmatpush1.msra.mxu0 %v871
    %894 = vmatprep.subr.mxu0 0.0
    %895 = vmatpush1.msra.mxu0 %v872
    %896 = vmatprep.subr.mxu0 0.0
    %897 = vmatpush1.msra.mxu0 %v882
    %898 = vmatprep.subr.mxu0 0.0
    %899 = vmatpush1.msra.mxu0 0.0
    %900 = vmatprep.subr.mxu0 0.0
    %901 = vmatpush1.msra.mxu0 0.0
    %902 = vmatprep.subr.mxu0 0.0
    %903 = vmatpush1.msra.mxu0 0.0
    %904 = vmatprep.subr.mxu0 0.0
    %905 = vmatpush1.msra.mxu0 0.0
    %906 = vmatprep.subr.mxu0 0.0
    %907 = vmatpush1.msra.mxu0 0.0
    %908 = vmatprep.subr.mxu0 0.0
    %909 = vmatpush1.msra.mxu0 0.0
    %910 = vmatprep.subr.mxu0 0.0
    %911 = vmatpush1.msra.mxu0 0.0
    %912 = vmatprep.subr.mxu0 0.0
    %913 = vmatpush1.msra.mxu0 0.0
    %914 = vmatprep.subr.mxu0 0.0
    %915 = vmatpush1.msra.mxu0 0.0
    %916 = vmatprep.subr.mxu0 0.0
    %917 = vmatpush1.msra.mxu0 0.0
    %918 = vmatprep.subr.mxu0 0.0
    %919 = vmatpush1.msra.mxu0 0.0
    %920 = vmatprep.subr.mxu0 0.0
    %921 = vmatpush1.msra.mxu0 0.0
    %922 = vmatprep.subr.mxu0 0.0
    %923 = vmatpush1.msra.mxu0 0.0
    %924 = vmatprep.subr.mxu0 0.0
    %925 = vmatpush1.msra.mxu0 0.0
    %926 = vmatprep.subr.mxu0 0.0
    %927 = vmatpush1.msra.mxu0 0.0
    %928 = vmatprep.subr.mxu0 0.0
    %929 = vmatpush1.msra.mxu0 0.0
    %930 = vmatprep.subr.mxu0 0.0
    %931 = vmatpush1.msra.mxu0 0.0
    %932 = vmatprep.subr.mxu0 0.0
    %933 = vmatpush1.msra.mxu0 0.0
    %934 = vmatprep.subr.mxu0 0.0
    %935 = vmatpush1.msra.mxu0 0.0
    %936 = vmatprep.subr.mxu0 0.0
    %937 = vmatpush1.msra.mxu0 0.0
    %938 = vmatprep.subr.mxu0 0.0
    %939 = vmatpush1.msra.mxu0 0.0
    %940 = vmatprep.subr.mxu0 0.0
    %941 = vmatpush1.msra.mxu0 0.0
    %942 = vmatprep.subr.mxu0 0.0
    %943 = vmatpush1.msra.mxu0 0.0
    %944 = vmatprep.subr.mxu0 0.0
    %945 = vmatpush1.msra.mxu0 0.0
    %946 = vmatprep.subr.mxu0 0.0
    %947 = vmatpush1.msra.mxu0 0.0
    %948 = vmatprep.mubr.f32.mxu0 0.0
    %949 = vmatmul.mubr.f32.gmra.mrb[0].mxu0 %v879
    %v950 = vpop.f32.mrb[0].mxu0
    %v951 = vadd.f32 %v877, %v950
    %v952 = vpop.f32.mrb[0].mxu0
    %953 = vdwg.mxu0
    %v954 = vmax.f32 %v951, 0.0
    %v955 = vlaneseq
    %v956 = vshrl.u32 %v955, 7
    %v957 = vsub.s32 0, %v956
    %v958 = vrot.slane %v854, %v957
    %v959 = vmul.f32 %v954, %v958
    %v960 = vsel %vm78, %v959, 0.0
    %961 = vadd.xlane.f32.xlu0 %v960
    %v962 = vpop.xlane.xlu0 %961
    %v963 = vadd.f32 %v849, %v962
    %s964 = scalar_lea.vmem [#allocation3], 32
    %v965 = vld [vmem:[%s964] sm:$0x1]
    %v966 = vld [vmem:[%s964 + $0x1] sm:$0x1]
    %v967 = vld [vmem:[%s964 + $0x2] sm:$0x1]
    %v968 = vld [vmem:[%s964 + $0x3] sm:$0x1]
    %v969 = vlaneseq
    %v970 = vshrl.u32 %v969, 7
    %v971 = vsub.s32 0, %v970
    %v972 = vrot.slane %v965, %v971
    %v973 = vmul.f32 %v54, %v972
    %v974 = vlaneseq
    %v975 = vshrl.u32 %v974, 7
    %v976 = vsub.s32 0, %v975
    %v977 = vrot.slane %v966, %v976
    %v978 = vadd.f32 %v973, %v977
    %v979 = vmax.f32 %v978, 0.0
    %s980 = scalar_lea.vmem [#allocation5], 448
    %v981 = vld [vmem:[%s980] sm:$0xff]
    %v982 = vld [vmem:[%s980 + $0x8] sm:$0xff]
    %v983 = vld [vmem:[%s980 + $0x10] sm:$0xff]
    %v984 = vld [vmem:[%s980 + $0x18] sm:$0xff]
    %v985 = vld [vmem:[%s980 + $0x20] sm:$0xff]
    %v986 = vld [vmem:[%s980 + $0x28] sm:$0xff]
    %v987 = vld [vmem:[%s980 + $0x30] sm:$0x3]
    %v988 = vlaneseq
    %v989 = vshrl.u32 %v988, 7
    %v990 = vsub.s32 0, %v989
    %v991 = vrot.slane %v967, %v990
    %v993 = vsel %vm78, %v979, 0
    %v996 = vsel %vm82, %v987, 0
    %998 = vmatprep.subr.mxu0 0.0
    %999 = vmatpush1.msra.mxu0 %v981
    %1000 = vmatprep.subr.mxu0 0.0
    %1001 = vmatpush1.msra.mxu0 %v982
    %1002 = vmatprep.subr.mxu0 0.0
    %1003 = vmatpush1.msra.mxu0 %v983
    %1004 = vmatprep.subr.mxu0 0.0
    %1005 = vmatpush1.msra.mxu0 %v984
    %1006 = vmatprep.subr.mxu0 0.0
    %1007 = vmatpush1.msra.mxu0 %v985
    %1008 = vmatprep.subr.mxu0 0.0
    %1009 = vmatpush1.msra.mxu0 %v986
    %1010 = vmatprep.subr.mxu0 0.0
    %1011 = vmatpush1.msra.mxu0 %v996
    %1012 = vmatprep.subr.mxu0 0.0
    %1013 = vmatpush1.msra.mxu0 0.0
    %1014 = vmatprep.subr.mxu0 0.0
    %1015 = vmatpush1.msra.mxu0 0.0
    %1016 = vmatprep.subr.mxu0 0.0
    %1017 = vmatpush1.msra.mxu0 0.0
    %1018 = vmatprep.subr.mxu0 0.0
    %1019 = vmatpush1.msra.mxu0 0.0
    %1020 = vmatprep.subr.mxu0 0.0
    %1021 = vmatpush1.msra.mxu0 0.0
    %1022 = vmatprep.subr.mxu0 0.0
    %1023 = vmatpush1.msra.mxu0 0.0
    %1024 = vmatprep.subr.mxu0 0.0
    %1025 = vmatpush1.msra.mxu0 0.0
    %1026 = vmatprep.subr.mxu0 0.0
    %1027 = vmatpush1.msra.mxu0 0.0
    %1028 = vmatprep.subr.mxu0 0.0
    %1029 = vmatpush1.msra.mxu0 0.0
    %1030 = vmatprep.subr.mxu0 0.0
    %1031 = vmatpush1.msra.mxu0 0.0
    %1032 = vmatprep.subr.mxu0 0.0
    %1033 = vmatpush1.msra.mxu0 0.0
    %1034 = vmatprep.subr.mxu0 0.0
    %1035 = vmatpush1.msra.mxu0 0.0
    %1036 = vmatprep.subr.mxu0 0.0
    %1037 = vmatpush1.msra.mxu0 0.0
    %1038 = vmatprep.subr.mxu0 0.0
    %1039 = vmatpush1.msra.mxu0 0.0
    %1040 = vmatprep.subr.mxu0 0.0
    %1041 = vmatpush1.msra.mxu0 0.0
    %1042 = vmatprep.subr.mxu0 0.0
    %1043 = vmatpush1.msra.mxu0 0.0
    %1044 = vmatprep.subr.mxu0 0.0
    %1045 = vmatpush1.msra.mxu0 0.0
    %1046 = vmatprep.subr.mxu0 0.0
    %1047 = vmatpush1.msra.mxu0 0.0
    %1048 = vmatprep.subr.mxu0 0.0
    %1049 = vmatpush1.msra.mxu0 0.0
    %1050 = vmatprep.subr.mxu0 0.0
    %1051 = vmatpush1.msra.mxu0 0.0
    %1052 = vmatprep.subr.mxu0 0.0
    %1053 = vmatpush1.msra.mxu0 0.0
    %1054 = vmatprep.subr.mxu0 0.0
    %1055 = vmatpush1.msra.mxu0 0.0
    %1056 = vmatprep.subr.mxu0 0.0
    %1057 = vmatpush1.msra.mxu0 0.0
    %1058 = vmatprep.subr.mxu0 0.0
    %1059 = vmatpush1.msra.mxu0 0.0
    %1060 = vmatprep.subr.mxu0 0.0
    %1061 = vmatpush1.msra.mxu0 0.0
    %1062 = vmatprep.mubr.f32.mxu0 0.0
    %1063 = vmatmul.mubr.f32.gmra.mrb[0].mxu0 %v993
    %v1064 = vpop.f32.mrb[0].mxu0
    %v1065 = vadd.f32 %v991, %v1064
    %v1066 = vpop.f32.mrb[0].mxu0
    %1067 = vdwg.mxu0
    %v1068 = vmax.f32 %v1065, 0.0
    %v1069 = vlaneseq
    %v1070 = vshrl.u32 %v1069, 7
    %v1071 = vsub.s32 0, %v1070
    %v1072 = vrot.slane %v968, %v1071
    %v1073 = vmul.f32 %v1068, %v1072
    %v1074 = vsel %vm78, %v1073, 0.0
    %1075 = vadd.xlane.f32.xlu0 %v1074
    %v1076 = vpop.xlane.xlu0 %1075
    %v1077 = vadd.f32 %v963, %v1076
    %s1078 = scalar_lea.vmem [#allocation3], 36
    %v1079 = vld [vmem:[%s1078] sm:$0x1]
    %v1080 = vld [vmem:[%s1078 + $0x1] sm:$0x1]
    %v1081 = vld [vmem:[%s1078 + $0x2] sm:$0x1]
    %v1082 = vld [vmem:[%s1078 + $0x3] sm:$0x1]
    %v1083 = vlaneseq
    %v1084 = vshrl.u32 %v1083, 7
    %v1085 = vsub.s32 0, %v1084
    %v1086 = vrot.slane %v1079, %v1085
    %v1087 = vmul.f32 %v54, %v1086
    %v1088 = vlaneseq
    %v1089 = vshrl.u32 %v1088, 7
    %v1090 = vsub.s32 0, %v1089
    %v1091 = vrot.slane %v1080, %v1090
    %v1092 = vadd.f32 %v1087, %v1091
    %v1093 = vmax.f32 %v1092, 0.0
    %s1094 = scalar_lea.vmem [#allocation5], 504
    %v1095 = vld [vmem:[%s1094] sm:$0xff]
    %v1096 = vld [vmem:[%s1094 + $0x8] sm:$0xff]
    %v1097 = vld [vmem:[%s1094 + $0x10] sm:$0xff]
    %v1098 = vld [vmem:[%s1094 + $0x18] sm:$0xff]
    %v1099 = vld [vmem:[%s1094 + $0x20] sm:$0xff]
    %v1100 = vld [vmem:[%s1094 + $0x28] sm:$0xff]
    %v1101 = vld [vmem:[%s1094 + $0x30] sm:$0x3]
    %v1102 = vlaneseq
    %v1103 = vshrl.u32 %v1102, 7
    %v1104 = vsub.s32 0, %v1103
    %v1105 = vrot.slane %v1081, %v1104
    %v1107 = vsel %vm78, %v1093, 0
    %v1110 = vsel %vm82, %v1101, 0
    %1112 = vmatprep.subr.mxu0 0.0
    %1113 = vmatpush1.msra.mxu0 %v1095
    %1114 = vmatprep.subr.mxu0 0.0
    %1115 = vmatpush1.msra.mxu0 %v1096
    %1116 = vmatprep.subr.mxu0 0.0
    %1117 = vmatpush1.msra.mxu0 %v1097
    %1118 = vmatprep.subr.mxu0 0.0
    %1119 = vmatpush1.msra.mxu0 %v1098
    %1120 = vmatprep.subr.mxu0 0.0
    %1121 = vmatpush1.msra.mxu0 %v1099
    %1122 = vmatprep.subr.mxu0 0.0
    %1123 = vmatpush1.msra.mxu0 %v1100
    %1124 = vmatprep.subr.mxu0 0.0
    %1125 = vmatpush1.msra.mxu0 %v1110
    %1126 = vmatprep.subr.mxu0 0.0
    %1127 = vmatpush1.msra.mxu0 0.0
    %1128 = vmatprep.subr.mxu0 0.0
    %1129 = vmatpush1.msra.mxu0 0.0
    %1130 = vmatprep.subr.mxu0 0.0
    %1131 = vmatpush1.msra.mxu0 0.0
    %1132 = vmatprep.subr.mxu0 0.0
    %1133 = vmatpush1.msra.mxu0 0.0
    %1134 = vmatprep.subr.mxu0 0.0
    %1135 = vmatpush1.msra.mxu0 0.0
    %1136 = vmatprep.subr.mxu0 0.0
    %1137 = vmatpush1.msra.mxu0 0.0
    %1138 = vmatprep.subr.mxu0 0.0
    %1139 = vmatpush1.msra.mxu0 0.0
    %1140 = vmatprep.subr.mxu0 0.0
    %1141 = vmatpush1.msra.mxu0 0.0
    %1142 = vmatprep.subr.mxu0 0.0
    %1143 = vmatpush1.msra.mxu0 0.0
    %1144 = vmatprep.subr.mxu0 0.0
    %1145 = vmatpush1.msra.mxu0 0.0
    %1146 = vmatprep.subr.mxu0 0.0
    %1147 = vmatpush1.msra.mxu0 0.0
    %1148 = vmatprep.subr.mxu0 0.0
    %1149 = vmatpush1.msra.mxu0 0.0
    %1150 = vmatprep.subr.mxu0 0.0
    %1151 = vmatpush1.msra.mxu0 0.0
    %1152 = vmatprep.subr.mxu0 0.0
    %1153 = vmatpush1.msra.mxu0 0.0
    %1154 = vmatprep.subr.mxu0 0.0
    %1155 = vmatpush1.msra.mxu0 0.0
    %1156 = vmatprep.subr.mxu0 0.0
    %1157 = vmatpush1.msra.mxu0 0.0
    %1158 = vmatprep.subr.mxu0 0.0
    %1159 = vmatpush1.msra.mxu0 0.0
    %1160 = vmatprep.subr.mxu0 0.0
    %1161 = vmatpush1.msra.mxu0 0.0
    %1162 = vmatprep.subr.mxu0 0.0
    %1163 = vmatpush1.msra.mxu0 0.0
    %1164 = vmatprep.subr.mxu0 0.0
    %1165 = vmatpush1.msra.mxu0 0.0
    %1166 = vmatprep.subr.mxu0 0.0
    %1167 = vmatpush1.msra.mxu0 0.0
    %1168 = vmatprep.subr.mxu0 0.0
    %1169 = vmatpush1.msra.mxu0 0.0
    %1170 = vmatprep.subr.mxu0 0.0
    %1171 = vmatpush1.msra.mxu0 0.0
    %1172 = vmatprep.subr.mxu0 0.0
    %1173 = vmatpush1.msra.mxu0 0.0
    %1174 = vmatprep.subr.mxu0 0.0
    %1175 = vmatpush1.msra.mxu0 0.0
    %1176 = vmatprep.mubr.f32.mxu0 0.0
    %1177 = vmatmul.mubr.f32.gmra.mrb[0].mxu0 %v1107
    %v1178 = vpop.f32.mrb[0].mxu0
    %v1179 = vadd.f32 %v1105, %v1178
    %v1180 = vpop.f32.mrb[0].mxu0
    %1181 = vdwg.mxu0
    %v1182 = vmax.f32 %v1179, 0.0
    %v1183 = vlaneseq
    %v1184 = vshrl.u32 %v1183, 7
    %v1185 = vsub.s32 0, %v1184
    %v1186 = vrot.slane %v1082, %v1185
    %v1187 = vmul.f32 %v1182, %v1186
    %v1188 = vsel %vm78, %v1187, 0.0
    %1189 = vadd.xlane.f32.xlu0 %v1188
    %v1190 = vpop.xlane.xlu0 %1189
    %v1191 = vadd.f32 %v1077, %v1190
    %s1192 = sld [smem:[#allocation2]]
    %v1193 = vstv %s1192
    %v1194 = vadd.f32 %v1191, %v1193
    %vm1195 = vcmask 7168
    %1196 = vst.msk [vmem:[%s4] sm:$0xff] %vm1195, %v1194
    // Predicated region
    $region26: #{average_mu_apply.1} parent=1 // pred_check
      _
    $region27: #{average_mu_apply.1} parent=1 // pred_check_branch
      %1198 = sbr.rel (0) target = $region29
    $region28: #{average_mu_apply.1} parent=1 // pred_region
      _
    $region29: #{average_mu_apply.1} parent=1 // pred_fallthru
      _
    // Predicated region
    $region30: #{average_mu_apply.1} parent=1 // pred_check
      _
    $region31: #{average_mu_apply.1} parent=1 // pred_check_branch
      %1200 = sbr.rel (0) target = $region33
    $region32: #{average_mu_apply.1} parent=1 // pred_region
      _
    $region33: #{average_mu_apply.1} parent=1 // pred_fallthru
      _
    %1201 = vsyncpa [#allocation4], 1
    %1202 = vsyncpa [#allocation6], 1

</llo_original>
